<compile_context>
chip_gen: v5e
topology: v5e:2x2
jax: 0.10.0
libtpu: 0.0.40
codegen_flags: <defaults>
</compile_context>

<pallas_src>
import numpy as np

import jax
import jax.numpy as jnp
from jax import lax
from jax.experimental import pallas as pl
from jax.experimental.pallas import tpu as pltpu

B = 2                     # batch
CIN, COUT = 1, 16         # conv channels
KH = KW = 5               # conv kernel
HIN = WIN = 28            # input spatial
HP = WP = 12              # pooled spatial
R = HP * WP               # 144 valid pooled positions per image
R_PAD = 256               # lane-aligned per-(member,image) page width
KPATCH = CIN * KH * KW    # 25
K_PAD = 32                # patch rows padded to a sublane multiple
NPAGE = 4 * B             # 4 pool-window members x B images
P = NPAGE * R_PAD         # 2048 = conv-matmul N
MW = B * R_PAD            # 512 = width of one pool-member slab
NHID, NHID_PAD = 100, 128
NOUT, NOUT_PAD = 2, 128
KFC1 = COUT * R           # 2304 = fc1 contraction (dense, PyTorch flatten order)

# ---------------------------------------------------------------------------
# im2col index map, built once with numpy.
# patches[k, (m*B + b)*R_PAD + r] = x[b, 0, 2*oi + di + ki, 2*oj + dj + kj]
#   k = ki*5 + kj (rows k >= 25 are zero-weight padding), m = di*2 + dj,
#   r = oi*12 + oj (lanes r >= 144 are padding; fc1 never reads them).
# ---------------------------------------------------------------------------
_oi = np.arange(HP).repeat(WP)
_oj = np.tile(np.arange(WP), HP)
IDX_NP = np.zeros((K_PAD, P), np.int32)
for _m in range(4):
    _di, _dj = _m // 2, _m % 2
    for _b in range(B):
        _base = (_m * B + _b) * R_PAD
        for _k in range(KPATCH):
            _ki, _kj = _k // KW, _k % KW
            IDX_NP[_k, _base:_base + R] = (
                _b * HIN * WIN + (2 * _oi + _di + _ki) * WIN + (2 * _oj + _dj + _kj))


# ---------------------------------------------------------------------------
# Fused kernel: conv (one matmul) + max-pool + bias + ReLU + flatten + fc1 + ReLU + fc2
# ---------------------------------------------------------------------------
def cnn_fused_kernel(p_ref, wc_ref, bc_ref, w1_ref, b1_ref, w2_ref, b2_ref,
                     o_ref, flat_ref):
    # p_ref : (32, 2048) bf16   im2col patches, lane = (m*B + b)*256 + r
    # wc_ref: (16, 32)   bf16   conv weights (K zero-padded 25->32)
    # bc_ref: (16, 1)    f32    conv bias
    # w1_ref: (2304, 128) bf16  fc1 weights (PyTorch flatten order, cols padded 100->128)
    # b1_ref: (1, 128)   f32    fc1 bias (padded)
    # w2_ref: (128, 128) bf16   fc2 weights (padded)
    # b2_ref: (1, 128)   f32    fc2 bias (padded)
    # o_ref : (B, 128)   f32    lane-dense output, cols [0:2] valid
    # flat_ref: (B, 2304) f32   VMEM scratch for the channel-major flatten

    # Conv for all 4*B pool-member pages in ONE lane-dense MXU matmul.
    s = jnp.dot(wc_ref[...], p_ref[...],
                preferred_element_type=jnp.float32)              # (16, 2048) f32

    # 2x2 max-pool = elementwise max over the four 512-lane member slabs.
    pre = jnp.maximum(jnp.maximum(s[:, 0:MW], s[:, MW:2 * MW]),
                      jnp.maximum(s[:, 2 * MW:3 * MW], s[:, 3 * MW:4 * MW]))  # (16, 512)

    # Bias + ReLU hoisted after the pooling max (monotone => same as relu-then-pool).
    pooled = jnp.maximum(pre + bc_ref[...], 0.0)                 # (16, 512) f32

    # Flatten to the PyTorch channel-major order flat[b, c*144 + r] through VMEM scratch
    # (static 144-wide stores; every lane of flat_ref is written, no init needed).
    for c in range(COUT):
        for b in range(B):
            flat_ref[pl.ds(b, 1), pl.ds(c * R, R)] = (
                pooled[c:c + 1, b * R_PAD:b * R_PAD + R])

    # fc1: one (B, 2304) @ (2304, 128) matmul, bf16 operands, f32 accumulation.
    act = flat_ref[...].astype(jnp.bfloat16)                     # (B, 2304)
    h = jnp.dot(act, w1_ref[...], preferred_element_type=jnp.float32) + b1_ref[...]
    h = jnp.maximum(h, 0.0)                                      # (B, 128) f32

    # fc2 (padded, lane-dense output).
    o_ref[...] = jnp.dot(h.astype(jnp.bfloat16), w2_ref[...],
                         preferred_element_type=jnp.float32) + b2_ref[...]


# ---------------------------------------------------------------------------
# One-time weight packing (outside the jitted forward).
# ---------------------------------------------------------------------------
def pack_params(conv_w, conv_b, fc1_w, fc1_b, fc2_w, fc2_b):
    # conv: (16,1,5,5) -> (16,25) -> zero-pad K to 32 -> bf16
    wc = conv_w.reshape(COUT, KPATCH)
    wc = jnp.pad(wc, ((0, 0), (0, K_PAD - KPATCH))).astype(jnp.bfloat16)   # (16, 32)
    bc = conv_b.reshape(COUT, 1)                                           # (16, 1) f32

    # fc1: transpose so rows follow the PyTorch flatten index c*144 + r; pad 100->128 cols.
    w1 = jnp.pad(fc1_w.T, ((0, 0), (0, NHID_PAD - NHID))).astype(jnp.bfloat16)  # (2304,128)
    b1 = jnp.pad(fc1_b, (0, NHID_PAD - NHID)).reshape(1, NHID_PAD)              # f32

    # fc2: transpose + zero-pad to (128, 128) so the output block is lane-dense.
    w2 = jnp.pad(fc2_w.T, ((0, NHID_PAD - NHID),
                           (0, NOUT_PAD - NOUT))).astype(jnp.bfloat16)          # (128,128)
    b2 = jnp.pad(fc2_b, (0, NOUT_PAD - NOUT)).reshape(1, NOUT_PAD)              # f32
    return wc, bc, w1, b1, w2, b2


# ---------------------------------------------------------------------------
# Jitted forward: single gather for im2col (already in kernel layout) + one pallas_call.
# ---------------------------------------------------------------------------
@jax.jit
def cnn_forward(x, wc, bc, w1, b1, w2, b2):
    # x: (B, 1, 28, 28) NCHW
    x_flat = x.reshape(B * HIN * WIN)
    patches = jnp.take(x_flat, jnp.asarray(IDX_NP), axis=0).astype(jnp.bfloat16)  # (32,2048)

    vmem = pltpu.MemorySpace.VMEM
    out = pl.pallas_call(
        cnn_fused_kernel,
        out_shape=jax.ShapeDtypeStruct((B, NOUT_PAD), jnp.float32),
        in_specs=[pl.BlockSpec(memory_space=vmem) for _ in range(7)],
        out_specs=pl.BlockSpec(memory_space=vmem),
        scratch_shapes=[pltpu.VMEM((B, KFC1), jnp.float32)],
    )(patches, wc, bc, w1, b1, w2, b2)
    return out[:, :NOUT]


# ---------------------------------------------------------------------------
# Pure-JAX reference (for validation)
# ---------------------------------------------------------------------------
def reference(x, conv_w, conv_b, fc1_w, fc1_b, fc2_w, fc2_b):
    out = lax.conv_general_dilated(
        x, conv_w, window_strides=(1, 1), padding="VALID",
        dimension_numbers=("NCHW", "OIHW", "NCHW"),
        precision=lax.Precision.HIGHEST,
    )
    out = out + conv_b[None, :, None, None]
    out = jnp.maximum(out, 0.0)
    out = lax.reduce_window(out, -jnp.inf, lax.max, (1, 1, 2, 2), (1, 1, 2, 2), "VALID")
    out = out.reshape(out.shape[0], -1)
    out = jnp.maximum(
        jnp.dot(out, fc1_w.T, precision=lax.Precision.HIGHEST) + fc1_b, 0.0)
    out = jnp.dot(out, fc2_w.T, precision=lax.Precision.HIGHEST) + fc2_b
    return out


if __name__ == "__main__":
    key = jax.random.PRNGKey(0)
    ks = jax.random.split(key, 7)
    conv_w = jax.random.normal(ks[0], (COUT, CIN, KH, KW), jnp.float32) * 0.1
    conv_b = jax.random.normal(ks[1], (COUT,), jnp.float32) * 0.1
    fc1_w = jax.random.normal(ks[2], (NHID, COUT * HP * WP), jnp.float32) * 0.02
    fc1_b = jax.random.normal(ks[3], (NHID,), jnp.float32) * 0.02
    fc2_w = jax.random.normal(ks[4], (NOUT, NHID), jnp.float32) * 0.1
    fc2_b = jax.random.normal(ks[5], (NOUT,), jnp.float32) * 0.1
    x = jax.random.normal(ks[6], (B, CIN, HIN, WIN), jnp.float32)

    packed = pack_params(conv_w, conv_b, fc1_w, fc1_b, fc2_w, fc2_b)  # one-time pack
    out = jax.block_until_ready(cnn_forward(x, *packed))

    ref = reference(x, conv_w, conv_b, fc1_w, fc1_b, fc2_w, fc2_b)
    if not bool(jnp.allclose(out, ref, atol=2e-2, rtol=2e-2)):
        raise AssertionError(f"mismatch: pallas={out}, ref={ref}")

    print("KERNEL_OK")
</pallas_src>

<mosaic_0001>
module attributes {stable_mosaic.version = 11 : i64} {
  func.func @cnn_fused_kernel(%arg0: memref<32x2048xbf16, #tpu.memory_space<vmem>>, %arg1: memref<16x32xbf16, #tpu.memory_space<vmem>>, %arg2: memref<16x1xf32, #tpu.memory_space<vmem>>, %arg3: memref<2304x128xbf16, #tpu.memory_space<vmem>>, %arg4: memref<1x128xf32, #tpu.memory_space<vmem>>, %arg5: memref<128x128xbf16, #tpu.memory_space<vmem>>, %arg6: memref<1x128xf32, #tpu.memory_space<vmem>>, %arg7: memref<2x128xf32, #tpu.memory_space<vmem>>, %arg8: memref<2x2304xf32, #tpu.memory_space<vmem>>) attributes {dimension_semantics = [], scalar_prefetch = 0 : i64, scratch_operands = 1 : i64, tpu.core_type = #tpu.core_type<tc>} {
    %c0 = arith.constant 0 : index
    %c0_0 = arith.constant 0 : index
    %0 = vector.load %arg1[%c0, %c0_0] : memref<16x32xbf16, #tpu.memory_space<vmem>>, vector<16x32xbf16>
    %c0_1 = arith.constant 0 : index
    %c0_2 = arith.constant 0 : index
    %1 = vector.load %arg0[%c0_1, %c0_2] : memref<32x2048xbf16, #tpu.memory_space<vmem>>, vector<32x2048xbf16>
    %cst = arith.constant dense<0.000000e+00> : vector<16x2048xf32>
    %2 = tpu.matmul %0, %1, %cst {dimension_numbers = #tpu.dot_dimension_numbers<[1], [0], [0], [1], [0, 0, 1, 1], [], []>} : vector<16x32xbf16>, vector<32x2048xbf16>, vector<16x2048xf32> -> vector<16x2048xf32>
    %3 = vector.extract_strided_slice %2 {offsets = [0, 0], sizes = [16, 512], strides = [1, 1]} : vector<16x2048xf32> to vector<16x512xf32>
    %4 = vector.extract_strided_slice %2 {offsets = [0, 512], sizes = [16, 512], strides = [1, 1]} : vector<16x2048xf32> to vector<16x512xf32>
    %5 = arith.maximumf %3, %4 : vector<16x512xf32>
    %6 = vector.extract_strided_slice %2 {offsets = [0, 1024], sizes = [16, 512], strides = [1, 1]} : vector<16x2048xf32> to vector<16x512xf32>
    %7 = vector.extract_strided_slice %2 {offsets = [0, 1536], sizes = [16, 512], strides = [1, 1]} : vector<16x2048xf32> to vector<16x512xf32>
    %8 = arith.maximumf %6, %7 : vector<16x512xf32>
    %9 = arith.maximumf %5, %8 : vector<16x512xf32>
    %c0_3 = arith.constant 0 : index
    %c0_4 = arith.constant 0 : index
    %10 = vector.load %arg2[%c0_3, %c0_4] : memref<16x1xf32, #tpu.memory_space<vmem>>, vector<16x1xf32>
    %11 = vector.broadcast %10 : vector<16x1xf32> to vector<16x512xf32>
    %12 = arith.addf %9, %11 : vector<16x512xf32>
    %cst_5 = arith.constant 0.000000e+00 : f32
    %13 = vector.broadcast %cst_5 : f32 to vector<16x512xf32>
    %14 = arith.maximumf %12, %13 : vector<16x512xf32>
    %15 = vector.extract_strided_slice %14 {offsets = [0, 0], sizes = [1, 144], strides = [1, 1]} : vector<16x512xf32> to vector<1x144xf32>
    %c0_6 = arith.constant 0 : index
    %c0_7 = arith.constant 0 : index
    %16 = vector.load %arg8[%c0_6, %c0_7] : memref<2x2304xf32, #tpu.memory_space<vmem>>, vector<1x144xf32>
    tpu.vector_store %arg8[%c0_6, %c0_7], %15 {strides = array<i32>} : memref<2x2304xf32, #tpu.memory_space<vmem>>, vector<1x144xf32>,
    %17 = vector.extract_strided_slice %14 {offsets = [0, 256], sizes = [1, 144], strides = [1, 1]} : vector<16x512xf32> to vector<1x144xf32>
    %c1 = arith.constant 1 : index
    %c0_8 = arith.constant 0 : index
    %18 = vector.load %arg8[%c1, %c0_8] : memref<2x2304xf32, #tpu.memory_space<vmem>>, vector<1x144xf32>
    tpu.vector_store %arg8[%c1, %c0_8], %17 {strides = array<i32>} : memref<2x2304xf32, #tpu.memory_space<vmem>>, vector<1x144xf32>,
    %19 = vector.extract_strided_slice %14 {offsets = [1, 0], sizes = [1, 144], strides = [1, 1]} : vector<16x512xf32> to vector<1x144xf32>
    %c0_9 = arith.constant 0 : index
    %c144 = arith.constant 144 : index
    %20 = vector.load %arg8[%c0_9, %c144] : memref<2x2304xf32, #tpu.memory_space<vmem>>, vector<1x144xf32>
    tpu.vector_store %arg8[%c0_9, %c144], %19 {strides = array<i32>} : memref<2x2304xf32, #tpu.memory_space<vmem>>, vector<1x144xf32>,
    %21 = vector.extract_strided_slice %14 {offsets = [1, 256], sizes = [1, 144], strides = [1, 1]} : vector<16x512xf32> to vector<1x144xf32>
    %c1_10 = arith.constant 1 : index
    %c144_11 = arith.constant 144 : index
    %22 = vector.load %arg8[%c1_10, %c144_11] : memref<2x2304xf32, #tpu.memory_space<vmem>>, vector<1x144xf32>
    tpu.vector_store %arg8[%c1_10, %c144_11], %21 {strides = array<i32>} : memref<2x2304xf32, #tpu.memory_space<vmem>>, vector<1x144xf32>,
    %23 = vector.extract_strided_slice %14 {offsets = [2, 0], sizes = [1, 144], strides = [1, 1]} : vector<16x512xf32> to vector<1x144xf32>
    %c0_12 = arith.constant 0 : index
    %c288 = arith.constant 288 : index
    %24 = vector.load %arg8[%c0_12, %c288] : memref<2x2304xf32, #tpu.memory_space<vmem>>, vector<1x144xf32>
    tpu.vector_store %arg8[%c0_12, %c288], %23 {strides = array<i32>} : memref<2x2304xf32, #tpu.memory_space<vmem>>, vector<1x144xf32>,
    %25 = vector.extract_strided_slice %14 {offsets = [2, 256], sizes = [1, 144], strides = [1, 1]} : vector<16x512xf32> to vector<1x144xf32>
    %c1_13 = arith.constant 1 : index
    %c288_14 = arith.constant 288 : index
    %26 = vector.load %arg8[%c1_13, %c288_14] : memref<2x2304xf32, #tpu.memory_space<vmem>>, vector<1x144xf32>
    tpu.vector_store %arg8[%c1_13, %c288_14], %25 {strides = array<i32>} : memref<2x2304xf32, #tpu.memory_space<vmem>>, vector<1x144xf32>,
    %27 = vector.extract_strided_slice %14 {offsets = [3, 0], sizes = [1, 144], strides = [1, 1]} : vector<16x512xf32> to vector<1x144xf32>
    %c0_15 = arith.constant 0 : index
    %c432 = arith.constant 432 : index
    %28 = vector.load %arg8[%c0_15, %c432] : memref<2x2304xf32, #tpu.memory_space<vmem>>, vector<1x144xf32>
    tpu.vector_store %arg8[%c0_15, %c432], %27 {strides = array<i32>} : memref<2x2304xf32, #tpu.memory_space<vmem>>, vector<1x144xf32>,
    %29 = vector.extract_strided_slice %14 {offsets = [3, 256], sizes = [1, 144], strides = [1, 1]} : vector<16x512xf32> to vector<1x144xf32>
    %c1_16 = arith.constant 1 : index
    %c432_17 = arith.constant 432 : index
    %30 = vector.load %arg8[%c1_16, %c432_17] : memref<2x2304xf32, #tpu.memory_space<vmem>>, vector<1x144xf32>
    tpu.vector_store %arg8[%c1_16, %c432_17], %29 {strides = array<i32>} : memref<2x2304xf32, #tpu.memory_space<vmem>>, vector<1x144xf32>,
    %31 = vector.extract_strided_slice %14 {offsets = [4, 0], sizes = [1, 144], strides = [1, 1]} : vector<16x512xf32> to vector<1x144xf32>
    %c0_18 = arith.constant 0 : index
    %c576 = arith.constant 576 : index
    %32 = vector.load %arg8[%c0_18, %c576] : memref<2x2304xf32, #tpu.memory_space<vmem>>, vector<1x144xf32>
    tpu.vector_store %arg8[%c0_18, %c576], %31 {strides = array<i32>} : memref<2x2304xf32, #tpu.memory_space<vmem>>, vector<1x144xf32>,
    %33 = vector.extract_strided_slice %14 {offsets = [4, 256], sizes = [1, 144], strides = [1, 1]} : vector<16x512xf32> to vector<1x144xf32>
    %c1_19 = arith.constant 1 : index
    %c576_20 = arith.constant 576 : index
    %34 = vector.load %arg8[%c1_19, %c576_20] : memref<2x2304xf32, #tpu.memory_space<vmem>>, vector<1x144xf32>
    tpu.vector_store %arg8[%c1_19, %c576_20], %33 {strides = array<i32>} : memref<2x2304xf32, #tpu.memory_space<vmem>>, vector<1x144xf32>,
    %35 = vector.extract_strided_slice %14 {offsets = [5, 0], sizes = [1, 144], strides = [1, 1]} : vector<16x512xf32> to vector<1x144xf32>
    %c0_21 = arith.constant 0 : index
    %c720 = arith.constant 720 : index
    %36 = vector.load %arg8[%c0_21, %c720] : memref<2x2304xf32, #tpu.memory_space<vmem>>, vector<1x144xf32>
    tpu.vector_store %arg8[%c0_21, %c720], %35 {strides = array<i32>} : memref<2x2304xf32, #tpu.memory_space<vmem>>, vector<1x144xf32>,
    %37 = vector.extract_strided_slice %14 {offsets = [5, 256], sizes = [1, 144], strides = [1, 1]} : vector<16x512xf32> to vector<1x144xf32>
    %c1_22 = arith.constant 1 : index
    %c720_23 = arith.constant 720 : index
    %38 = vector.load %arg8[%c1_22, %c720_23] : memref<2x2304xf32, #tpu.memory_space<vmem>>, vector<1x144xf32>
    tpu.vector_store %arg8[%c1_22, %c720_23], %37 {strides = array<i32>} : memref<2x2304xf32, #tpu.memory_space<vmem>>, vector<1x144xf32>,
    %39 = vector.extract_strided_slice %14 {offsets = [6, 0], sizes = [1, 144], strides = [1, 1]} : vector<16x512xf32> to vector<1x144xf32>
    %c0_24 = arith.constant 0 : index
    %c864 = arith.constant 864 : index
    %40 = vector.load %arg8[%c0_24, %c864] : memref<2x2304xf32, #tpu.memory_space<vmem>>, vector<1x144xf32>
    tpu.vector_store %arg8[%c0_24, %c864], %39 {strides = array<i32>} : memref<2x2304xf32, #tpu.memory_space<vmem>>, vector<1x144xf32>,
    %41 = vector.extract_strided_slice %14 {offsets = [6, 256], sizes = [1, 144], strides = [1, 1]} : vector<16x512xf32> to vector<1x144xf32>
    %c1_25 = arith.constant 1 : index
    %c864_26 = arith.constant 864 : index
    %42 = vector.load %arg8[%c1_25, %c864_26] : memref<2x2304xf32, #tpu.memory_space<vmem>>, vector<1x144xf32>
    tpu.vector_store %arg8[%c1_25, %c864_26], %41 {strides = array<i32>} : memref<2x2304xf32, #tpu.memory_space<vmem>>, vector<1x144xf32>,
    %43 = vector.extract_strided_slice %14 {offsets = [7, 0], sizes = [1, 144], strides = [1, 1]} : vector<16x512xf32> to vector<1x144xf32>
    %c0_27 = arith.constant 0 : index
    %c1008 = arith.constant 1008 : index
    %44 = vector.load %arg8[%c0_27, %c1008] : memref<2x2304xf32, #tpu.memory_space<vmem>>, vector<1x144xf32>
    tpu.vector_store %arg8[%c0_27, %c1008], %43 {strides = array<i32>} : memref<2x2304xf32, #tpu.memory_space<vmem>>, vector<1x144xf32>,
    %45 = vector.extract_strided_slice %14 {offsets = [7, 256], sizes = [1, 144], strides = [1, 1]} : vector<16x512xf32> to vector<1x144xf32>
    %c1_28 = arith.constant 1 : index
    %c1008_29 = arith.constant 1008 : index
    %46 = vector.load %arg8[%c1_28, %c1008_29] : memref<2x2304xf32, #tpu.memory_space<vmem>>, vector<1x144xf32>
    tpu.vector_store %arg8[%c1_28, %c1008_29], %45 {strides = array<i32>} : memref<2x2304xf32, #tpu.memory_space<vmem>>, vector<1x144xf32>,
    %47 = vector.extract_strided_slice %14 {offsets = [8, 0], sizes = [1, 144], strides = [1, 1]} : vector<16x512xf32> to vector<1x144xf32>
    %c0_30 = arith.constant 0 : index
    %c1152 = arith.constant 1152 : index
    %48 = vector.load %arg8[%c0_30, %c1152] : memref<2x2304xf32, #tpu.memory_space<vmem>>, vector<1x144xf32>
    tpu.vector_store %arg8[%c0_30, %c1152], %47 {strides = array<i32>} : memref<2x2304xf32, #tpu.memory_space<vmem>>, vector<1x144xf32>,
    %49 = vector.extract_strided_slice %14 {offsets = [8, 256], sizes = [1, 144], strides = [1, 1]} : vector<16x512xf32> to vector<1x144xf32>
    %c1_31 = arith.constant 1 : index
    %c1152_32 = arith.constant 1152 : index
    %50 = vector.load %arg8[%c1_31, %c1152_32] : memref<2x2304xf32, #tpu.memory_space<vmem>>, vector<1x144xf32>
    tpu.vector_store %arg8[%c1_31, %c1152_32], %49 {strides = array<i32>} : memref<2x2304xf32, #tpu.memory_space<vmem>>, vector<1x144xf32>,
    %51 = vector.extract_strided_slice %14 {offsets = [9, 0], sizes = [1, 144], strides = [1, 1]} : vector<16x512xf32> to vector<1x144xf32>
    %c0_33 = arith.constant 0 : index
    %c1296 = arith.constant 1296 : index
    %52 = vector.load %arg8[%c0_33, %c1296] : memref<2x2304xf32, #tpu.memory_space<vmem>>, vector<1x144xf32>
    tpu.vector_store %arg8[%c0_33, %c1296], %51 {strides = array<i32>} : memref<2x2304xf32, #tpu.memory_space<vmem>>, vector<1x144xf32>,
    %53 = vector.extract_strided_slice %14 {offsets = [9, 256], sizes = [1, 144], strides = [1, 1]} : vector<16x512xf32> to vector<1x144xf32>
    %c1_34 = arith.constant 1 : index
    %c1296_35 = arith.constant 1296 : index
    %54 = vector.load %arg8[%c1_34, %c1296_35] : memref<2x2304xf32, #tpu.memory_space<vmem>>, vector<1x144xf32>
    tpu.vector_store %arg8[%c1_34, %c1296_35], %53 {strides = array<i32>} : memref<2x2304xf32, #tpu.memory_space<vmem>>, vector<1x144xf32>,
    %55 = vector.extract_strided_slice %14 {offsets = [10, 0], sizes = [1, 144], strides = [1, 1]} : vector<16x512xf32> to vector<1x144xf32>
    %c0_36 = arith.constant 0 : index
    %c1440 = arith.constant 1440 : index
    %56 = vector.load %arg8[%c0_36, %c1440] : memref<2x2304xf32, #tpu.memory_space<vmem>>, vector<1x144xf32>
    tpu.vector_store %arg8[%c0_36, %c1440], %55 {strides = array<i32>} : memref<2x2304xf32, #tpu.memory_space<vmem>>, vector<1x144xf32>,
    %57 = vector.extract_strided_slice %14 {offsets = [10, 256], sizes = [1, 144], strides = [1, 1]} : vector<16x512xf32> to vector<1x144xf32>
    %c1_37 = arith.constant 1 : index
    %c1440_38 = arith.constant 1440 : index
    %58 = vector.load %arg8[%c1_37, %c1440_38] : memref<2x2304xf32, #tpu.memory_space<vmem>>, vector<1x144xf32>
    tpu.vector_store %arg8[%c1_37, %c1440_38], %57 {strides = array<i32>} : memref<2x2304xf32, #tpu.memory_space<vmem>>, vector<1x144xf32>,
    %59 = vector.extract_strided_slice %14 {offsets = [11, 0], sizes = [1, 144], strides = [1, 1]} : vector<16x512xf32> to vector<1x144xf32>
    %c0_39 = arith.constant 0 : index
    %c1584 = arith.constant 1584 : index
    %60 = vector.load %arg8[%c0_39, %c1584] : memref<2x2304xf32, #tpu.memory_space<vmem>>, vector<1x144xf32>
    tpu.vector_store %arg8[%c0_39, %c1584], %59 {strides = array<i32>} : memref<2x2304xf32, #tpu.memory_space<vmem>>, vector<1x144xf32>,
    %61 = vector.extract_strided_slice %14 {offsets = [11, 256], sizes = [1, 144], strides = [1, 1]} : vector<16x512xf32> to vector<1x144xf32>
    %c1_40 = arith.constant 1 : index
    %c1584_41 = arith.constant 1584 : index
    %62 = vector.load %arg8[%c1_40, %c1584_41] : memref<2x2304xf32, #tpu.memory_space<vmem>>, vector<1x144xf32>
    tpu.vector_store %arg8[%c1_40, %c1584_41], %61 {strides = array<i32>} : memref<2x2304xf32, #tpu.memory_space<vmem>>, vector<1x144xf32>,
    %63 = vector.extract_strided_slice %14 {offsets = [12, 0], sizes = [1, 144], strides = [1, 1]} : vector<16x512xf32> to vector<1x144xf32>
    %c0_42 = arith.constant 0 : index
    %c1728 = arith.constant 1728 : index
    %64 = vector.load %arg8[%c0_42, %c1728] : memref<2x2304xf32, #tpu.memory_space<vmem>>, vector<1x144xf32>
    tpu.vector_store %arg8[%c0_42, %c1728], %63 {strides = array<i32>} : memref<2x2304xf32, #tpu.memory_space<vmem>>, vector<1x144xf32>,
    %65 = vector.extract_strided_slice %14 {offsets = [12, 256], sizes = [1, 144], strides = [1, 1]} : vector<16x512xf32> to vector<1x144xf32>
    %c1_43 = arith.constant 1 : index
    %c1728_44 = arith.constant 1728 : index
    %66 = vector.load %arg8[%c1_43, %c1728_44] : memref<2x2304xf32, #tpu.memory_space<vmem>>, vector<1x144xf32>
    tpu.vector_store %arg8[%c1_43, %c1728_44], %65 {strides = array<i32>} : memref<2x2304xf32, #tpu.memory_space<vmem>>, vector<1x144xf32>,
    %67 = vector.extract_strided_slice %14 {offsets = [13, 0], sizes = [1, 144], strides = [1, 1]} : vector<16x512xf32> to vector<1x144xf32>
    %c0_45 = arith.constant 0 : index
    %c1872 = arith.constant 1872 : index
    %68 = vector.load %arg8[%c0_45, %c1872] : memref<2x2304xf32, #tpu.memory_space<vmem>>, vector<1x144xf32>
    tpu.vector_store %arg8[%c0_45, %c1872], %67 {strides = array<i32>} : memref<2x2304xf32, #tpu.memory_space<vmem>>, vector<1x144xf32>,
    %69 = vector.extract_strided_slice %14 {offsets = [13, 256], sizes = [1, 144], strides = [1, 1]} : vector<16x512xf32> to vector<1x144xf32>
    %c1_46 = arith.constant 1 : index
    %c1872_47 = arith.constant 1872 : index
    %70 = vector.load %arg8[%c1_46, %c1872_47] : memref<2x2304xf32, #tpu.memory_space<vmem>>, vector<1x144xf32>
    tpu.vector_store %arg8[%c1_46, %c1872_47], %69 {strides = array<i32>} : memref<2x2304xf32, #tpu.memory_space<vmem>>, vector<1x144xf32>,
    %71 = vector.extract_strided_slice %14 {offsets = [14, 0], sizes = [1, 144], strides = [1, 1]} : vector<16x512xf32> to vector<1x144xf32>
    %c0_48 = arith.constant 0 : index
    %c2016 = arith.constant 2016 : index
    %72 = vector.load %arg8[%c0_48, %c2016] : memref<2x2304xf32, #tpu.memory_space<vmem>>, vector<1x144xf32>
    tpu.vector_store %arg8[%c0_48, %c2016], %71 {strides = array<i32>} : memref<2x2304xf32, #tpu.memory_space<vmem>>, vector<1x144xf32>,
    %73 = vector.extract_strided_slice %14 {offsets = [14, 256], sizes = [1, 144], strides = [1, 1]} : vector<16x512xf32> to vector<1x144xf32>
    %c1_49 = arith.constant 1 : index
    %c2016_50 = arith.constant 2016 : index
    %74 = vector.load %arg8[%c1_49, %c2016_50] : memref<2x2304xf32, #tpu.memory_space<vmem>>, vector<1x144xf32>
    tpu.vector_store %arg8[%c1_49, %c2016_50], %73 {strides = array<i32>} : memref<2x2304xf32, #tpu.memory_space<vmem>>, vector<1x144xf32>,
    %75 = vector.extract_strided_slice %14 {offsets = [15, 0], sizes = [1, 144], strides = [1, 1]} : vector<16x512xf32> to vector<1x144xf32>
    %c0_51 = arith.constant 0 : index
    %c2160 = arith.constant 2160 : index
    %76 = vector.load %arg8[%c0_51, %c2160] : memref<2x2304xf32, #tpu.memory_space<vmem>>, vector<1x144xf32>
    tpu.vector_store %arg8[%c0_51, %c2160], %75 {strides = array<i32>} : memref<2x2304xf32, #tpu.memory_space<vmem>>, vector<1x144xf32>,
    %77 = vector.extract_strided_slice %14 {offsets = [15, 256], sizes = [1, 144], strides = [1, 1]} : vector<16x512xf32> to vector<1x144xf32>
    %c1_52 = arith.constant 1 : index
    %c2160_53 = arith.constant 2160 : index
    %78 = vector.load %arg8[%c1_52, %c2160_53] : memref<2x2304xf32, #tpu.memory_space<vmem>>, vector<1x144xf32>
    tpu.vector_store %arg8[%c1_52, %c2160_53], %77 {strides = array<i32>} : memref<2x2304xf32, #tpu.memory_space<vmem>>, vector<1x144xf32>,
    %c0_54 = arith.constant 0 : index
    %c0_55 = arith.constant 0 : index
    %79 = vector.load %arg8[%c0_54, %c0_55] : memref<2x2304xf32, #tpu.memory_space<vmem>>, vector<2x2304xf32>
    %80 = arith.truncf %79 : vector<2x2304xf32> to vector<2x2304xbf16>
    %c0_56 = arith.constant 0 : index
    %c0_57 = arith.constant 0 : index
    %81 = vector.load %arg3[%c0_56, %c0_57] : memref<2304x128xbf16, #tpu.memory_space<vmem>>, vector<2304x128xbf16>
    %cst_58 = arith.constant dense<0.000000e+00> : vector<2x128xf32>
    %82 = tpu.matmul %80, %81, %cst_58 {dimension_numbers = #tpu.dot_dimension_numbers<[1], [0], [0], [1], [0, 0, 1, 1], [], []>} : vector<2x2304xbf16>, vector<2304x128xbf16>, vector<2x128xf32> -> vector<2x128xf32>
    %c0_59 = arith.constant 0 : index
    %c0_60 = arith.constant 0 : index
    %83 = vector.load %arg4[%c0_59, %c0_60] : memref<1x128xf32, #tpu.memory_space<vmem>>, vector<1x128xf32>
    %84 = vector.broadcast %83 : vector<1x128xf32> to vector<2x128xf32>
    %85 = arith.addf %82, %84 : vector<2x128xf32>
    %cst_61 = arith.constant 0.000000e+00 : f32
    %86 = vector.broadcast %cst_61 : f32 to vector<2x128xf32>
    %87 = arith.maximumf %85, %86 : vector<2x128xf32>
    %88 = arith.truncf %87 : vector<2x128xf32> to vector<2x128xbf16>
    %c0_62 = arith.constant 0 : index
    %c0_63 = arith.constant 0 : index
    %89 = vector.load %arg5[%c0_62, %c0_63] : memref<128x128xbf16, #tpu.memory_space<vmem>>, vector<128x128xbf16>
    %cst_64 = arith.constant dense<0.000000e+00> : vector<2x128xf32>
    %90 = tpu.matmul %88, %89, %cst_64 {dimension_numbers = #tpu.dot_dimension_numbers<[1], [0], [0], [1], [0, 0, 1, 1], [], []>} : vector<2x128xbf16>, vector<128x128xbf16>, vector<2x128xf32> -> vector<2x128xf32>
    %c0_65 = arith.constant 0 : index
    %c0_66 = arith.constant 0 : index
    %91 = vector.load %arg6[%c0_65, %c0_66] : memref<1x128xf32, #tpu.memory_space<vmem>>, vector<1x128xf32>
    %92 = vector.broadcast %91 : vector<1x128xf32> to vector<2x128xf32>
    %93 = arith.addf %90, %92 : vector<2x128xf32>
    %c0_67 = arith.constant 0 : index
    %c0_68 = arith.constant 0 : index
    %94 = vector.load %arg7[%c0_67, %c0_68] : memref<2x128xf32, #tpu.memory_space<vmem>>, vector<2x128xf32>
    tpu.vector_store %arg7[%c0_67, %c0_68], %93 {strides = array<i32>} : memref<2x128xf32, #tpu.memory_space<vmem>>, vector<2x128xf32>,
    return
  }
}

</mosaic_0001>

<llo_original>
// kernel: cnn_forward.1
$region0: #{cnn_forward.1}
  #allocation0 [shape = 'u32[]', space=smem, size = 0x4, offset = 0x4, fixed_abs, tag = 'smem constant byte address 0x4 - core index']
  #allocation1 [shape = 'u32[72,128]{1,0:T(1,128)}', space=vmem, size = 0x9000, scoped, tag = 'internal scratch']
  #allocation2 [shape = 'f32[2,2304]{1,0:T(2,128)}', space=vmem, size = 0x4800, scoped, tag = 'scratch operand']
  %s0 = inlined_call_operand.vmem [shape: bf16[32,2048], index: 0, kind: input, shape index: {}]
  %s1 = inlined_call_operand.vmem [shape: bf16[16,32], index: 1, kind: input, shape index: {}]
  %s2 = inlined_call_operand.vmem [shape: f32[16,1], index: 2, kind: input, shape index: {}]
  %s3 = inlined_call_operand.vmem [shape: bf16[2304,128], index: 3, kind: input, shape index: {}]
  %s4 = inlined_call_operand.vmem [shape: f32[1,128], index: 4, kind: input, shape index: {}]
  %s5 = inlined_call_operand.vmem [shape: bf16[128,128], index: 5, kind: input, shape index: {}]
  %s6 = inlined_call_operand.vmem [shape: f32[1,128], index: 6, kind: input, shape index: {}]
  %s7 = inlined_call_operand.hbm [shape: f32[2,128], index: 7, kind: output, shape index: {}]
  %s8 = sld [smem:[#allocation0]]
  $region38: #{cnn_forward.1} parent=0
    _
  %s10 = ssub.s32 1, %s8
  %s11 = scalar_select 0, %s10, %s8
  $region1: #{cnn_forward.1} parent=0
    #allocation3 [shape = 'u8[1024]{0}', space=vmem, size = 0x400, scoped, tag = 'output window, operand 0, single buffered']
    #allocation4 [shape = 's32[1]{0}', space=sflag, size = 0x4, scoped, tag = 'scoped memory for cnn_forward.1']
    %12 = vsyncpa [#allocation4], 0
    // Predicated region
    $region2: #{cnn_forward.1} parent=1 // pred_check
      _
    $region3: #{cnn_forward.1} parent=1 // pred_check_branch
      %14 = sbr.rel (0) target = $region5
    $region4: #{cnn_forward.1} parent=1 // pred_region
      _
    $region5: #{cnn_forward.1} parent=1 // pred_fallthru
      _
    // Predicated region
    $region6: #{cnn_forward.1} parent=1 // pred_check
      _
    $region7: #{cnn_forward.1} parent=1 // pred_check_branch
      %16 = sbr.rel (0) target = $region9
    $region8: #{cnn_forward.1} parent=1 // pred_region
      _
    $region9: #{cnn_forward.1} parent=1 // pred_fallthru
      _
    // Predicated region
    $region10: #{cnn_forward.1} parent=1 // pred_check
      _
    $region11: #{cnn_forward.1} parent=1 // pred_check_branch
      %18 = sbr.rel (0) target = $region13
    $region12: #{cnn_forward.1} parent=1 // pred_region
      _
    $region13: #{cnn_forward.1} parent=1 // pred_fallthru
      _
    // Predicated region
    $region14: #{cnn_forward.1} parent=1 // pred_check
      _
    $region15: #{cnn_forward.1} parent=1 // pred_check_branch
      %20 = sbr.rel (0) target = $region17
    $region16: #{cnn_forward.1} parent=1 // pred_region
      _
    $region17: #{cnn_forward.1} parent=1 // pred_fallthru
      _
    // Predicated region
    $region18: #{cnn_forward.1} parent=1 // pred_check
      _
    $region19: #{cnn_forward.1} parent=1 // pred_check_branch
      %22 = sbr.rel (0) target = $region21
    $region20: #{cnn_forward.1} parent=1 // pred_region
      _
    $region21: #{cnn_forward.1} parent=1 // pred_fallthru
      _
    // Predicated region
    $region22: #{cnn_forward.1} parent=1 // pred_check
      _
    $region23: #{cnn_forward.1} parent=1 // pred_check_branch
      %24 = sbr.rel (0) target = $region25
    $region24: #{cnn_forward.1} parent=1 // pred_region
      _
    $region25: #{cnn_forward.1} parent=1 // pred_fallthru
      _
    // Predicated region
    $region26: #{cnn_forward.1} parent=1 // pred_check
      _
    $region27: #{cnn_forward.1} parent=1 // pred_check_branch
      %26 = sbr.rel (0) target = $region29
    $region28: #{cnn_forward.1} parent=1 // pred_region
      _
    $region29: #{cnn_forward.1} parent=1 // pred_fallthru
      _
    %v28 = vld [vmem:[%s1] sm:$0xf]
    %v29 = vld [vmem:[%s1 + $0x4] sm:$0xf]
    %v30 = vld [vmem:[%s0] sm:$0xff]
    %v31 = vld [vmem:[%s0 + $0x8] sm:$0xff]
    %v32 = vld [vmem:[%s0 + $0x10] sm:$0xff]
    %v33 = vld [vmem:[%s0 + $0x18] sm:$0xff]
    %v34 = vld [vmem:[%s0 + $0x20] sm:$0xff]
    %v35 = vld [vmem:[%s0 + $0x28] sm:$0xff]
    %v36 = vld [vmem:[%s0 + $0x30] sm:$0xff]
    %v37 = vld [vmem:[%s0 + $0x38] sm:$0xff]
    %v38 = vld [vmem:[%s0 + $0x40] sm:$0xff]
    %v39 = vld [vmem:[%s0 + $0x48] sm:$0xff]
    %v40 = vld [vmem:[%s0 + $0x50] sm:$0xff]
    %v41 = vld [vmem:[%s0 + $0x58] sm:$0xff]
    %v42 = vld [vmem:[%s0 + $0x60] sm:$0xff]
    %v43 = vld [vmem:[%s0 + $0x68] sm:$0xff]
    %v44 = vld [vmem:[%s0 + $0x70] sm:$0xff]
    %v45 = vld [vmem:[%s0 + $0x78] sm:$0xff]
    %v46 = vld [vmem:[%s0 + $0x80] sm:$0xff]
    %v47 = vld [vmem:[%s0 + $0x88] sm:$0xff]
    %v48 = vld [vmem:[%s0 + $0x90] sm:$0xff]
    %v49 = vld [vmem:[%s0 + $0x98] sm:$0xff]
    %v50 = vld [vmem:[%s0 + $0xa0] sm:$0xff]
    %v51 = vld [vmem:[%s0 + $0xa8] sm:$0xff]
    %v52 = vld [vmem:[%s0 + $0xb0] sm:$0xff]
    %v53 = vld [vmem:[%s0 + $0xb8] sm:$0xff]
    %v54 = vld [vmem:[%s0 + $0xc0] sm:$0xff]
    %v55 = vld [vmem:[%s0 + $0xc8] sm:$0xff]
    %v56 = vld [vmem:[%s0 + $0xd0] sm:$0xff]
    %v57 = vld [vmem:[%s0 + $0xd8] sm:$0xff]
    %v58 = vld [vmem:[%s0 + $0xe0] sm:$0xff]
    %v59 = vld [vmem:[%s0 + $0xe8] sm:$0xff]
    %v60 = vld [vmem:[%s0 + $0xf0] sm:$0xff]
    %v61 = vld [vmem:[%s0 + $0xf8] sm:$0xff]
    %v64 = vunpack.c.l.b16 %v28
    %v65 = vunpack.c.l.b16 %v29
    %v66 = vpack.c.b16 %v65, %v64
    %v99 = vunpack.c.l.b16 %v30
    %v100 = vunpack.c.h.b16 %v30
    %v101 = vunpack.c.l.b16 %v31
    %v102 = vunpack.c.h.b16 %v31
    %v103 = vunpack.c.l.b16 %v32
    %v104 = vunpack.c.h.b16 %v32
    %v105 = vunpack.c.l.b16 %v33
    %v106 = vunpack.c.h.b16 %v33
    %v107 = vunpack.c.l.b16 %v34
    %v108 = vunpack.c.h.b16 %v34
    %v109 = vunpack.c.l.b16 %v35
    %v110 = vunpack.c.h.b16 %v35
    %v111 = vunpack.c.l.b16 %v36
    %v112 = vunpack.c.h.b16 %v36
    %v113 = vunpack.c.l.b16 %v37
    %v114 = vunpack.c.h.b16 %v37
    %v115 = vunpack.c.l.b16 %v38
    %v116 = vunpack.c.h.b16 %v38
    %v117 = vunpack.c.l.b16 %v39
    %v118 = vunpack.c.h.b16 %v39
    %v119 = vunpack.c.l.b16 %v40
    %v120 = vunpack.c.h.b16 %v40
    %v121 = vunpack.c.l.b16 %v41
    %v122 = vunpack.c.h.b16 %v41
    %v123 = vunpack.c.l.b16 %v42
    %v124 = vunpack.c.h.b16 %v42
    %v125 = vunpack.c.l.b16 %v43
    %v126 = vunpack.c.h.b16 %v43
    %v127 = vunpack.c.l.b16 %v44
    %v128 = vunpack.c.h.b16 %v44
    %v129 = vunpack.c.l.b16 %v45
    %v130 = vunpack.c.h.b16 %v45
    %v131 = vunpack.c.l.b16 %v46
    %v132 = vunpack.c.h.b16 %v46
    %v133 = vunpack.c.l.b16 %v47
    %v134 = vunpack.c.h.b16 %v47
    %v135 = vunpack.c.l.b16 %v48
    %v136 = vunpack.c.h.b16 %v48
    %v137 = vunpack.c.l.b16 %v49
    %v138 = vunpack.c.h.b16 %v49
    %v139 = vunpack.c.l.b16 %v50
    %v140 = vunpack.c.h.b16 %v50
    %v141 = vunpack.c.l.b16 %v51
    %v142 = vunpack.c.h.b16 %v51
    %v143 = vunpack.c.l.b16 %v52
    %v144 = vunpack.c.h.b16 %v52
    %v145 = vunpack.c.l.b16 %v53
    %v146 = vunpack.c.h.b16 %v53
    %v147 = vunpack.c.l.b16 %v54
    %v148 = vunpack.c.h.b16 %v54
    %v149 = vunpack.c.l.b16 %v55
    %v150 = vunpack.c.h.b16 %v55
    %v151 = vunpack.c.l.b16 %v56
    %v152 = vunpack.c.h.b16 %v56
    %v153 = vunpack.c.l.b16 %v57
    %v154 = vunpack.c.h.b16 %v57
    %v155 = vunpack.c.l.b16 %v58
    %v156 = vunpack.c.h.b16 %v58
    %v157 = vunpack.c.l.b16 %v59
    %v158 = vunpack.c.h.b16 %v59
    %v159 = vunpack.c.l.b16 %v60
    %v160 = vunpack.c.h.b16 %v60
    %v161 = vunpack.c.l.b16 %v61
    %v162 = vunpack.c.h.b16 %v61
    %v163 = vpack.c.b16 %v115, %v99
    %v164 = vpack.c.b16 %v116, %v100
    %v165 = vpack.c.b16 %v117, %v101
    %v166 = vpack.c.b16 %v118, %v102
    %v167 = vpack.c.b16 %v119, %v103
    %v168 = vpack.c.b16 %v120, %v104
    %v169 = vpack.c.b16 %v121, %v105
    %v170 = vpack.c.b16 %v122, %v106
    %v171 = vpack.c.b16 %v123, %v107
    %v172 = vpack.c.b16 %v124, %v108
    %v173 = vpack.c.b16 %v125, %v109
    %v174 = vpack.c.b16 %v126, %v110
    %v175 = vpack.c.b16 %v127, %v111
    %v176 = vpack.c.b16 %v128, %v112
    %v177 = vpack.c.b16 %v129, %v113
    %v178 = vpack.c.b16 %v130, %v114
    %v179 = vpack.c.b16 %v147, %v131
    %v180 = vpack.c.b16 %v148, %v132
    %v181 = vpack.c.b16 %v149, %v133
    %v182 = vpack.c.b16 %v150, %v134
    %v183 = vpack.c.b16 %v151, %v135
    %v184 = vpack.c.b16 %v152, %v136
    %v185 = vpack.c.b16 %v153, %v137
    %v186 = vpack.c.b16 %v154, %v138
    %v187 = vpack.c.b16 %v155, %v139
    %v188 = vpack.c.b16 %v156, %v140
    %v189 = vpack.c.b16 %v157, %v141
    %v190 = vpack.c.b16 %v158, %v142
    %v191 = vpack.c.b16 %v159, %v143
    %v192 = vpack.c.b16 %v160, %v144
    %v193 = vpack.c.b16 %v161, %v145
    %v194 = vpack.c.b16 %v162, %v146
    %vm227 = vcmask 261120
    %v229 = vsel %vm227, %v66, 0
    %231 = vmatpush.bf16.msra.mxu0 0
    %232 = vmatpush.bf16.msra.mxu0 0
    %233 = vmatpush.bf16.msra.mxu0 0
    %234 = vmatpush.bf16.msra.mxu0 0
    %235 = vmatpush.bf16.msra.mxu0 0
    %236 = vmatpush.bf16.msra.mxu0 0
    %237 = vmatpush.bf16.msra.mxu0 %v179
    %238 = vmatpush.bf16.msra.mxu0 %v163
    %239 = vmatmul.bf16.gmra.mxu0 %v229
    %v240 = vpop.f32.mrf.mxu0
    %v241 = vadd.f32 0.0, %v240
    %v242 = vpop.f32.mrf.mxu0
    %v243 = vadd.f32 0.0, %v242
    %244 = vdwg.mxu0
    %245 = vmatpush.bf16.msra.mxu0 0
    %246 = vmatpush.bf16.msra.mxu0 0
    %247 = vmatpush.bf16.msra.mxu0 0
    %248 = vmatpush.bf16.msra.mxu0 0
    %249 = vmatpush.bf16.msra.mxu0 0
    %250 = vmatpush.bf16.msra.mxu0 0
    %251 = vmatpush.bf16.msra.mxu0 %v180
    %252 = vmatpush.bf16.msra.mxu0 %v164
    %253 = vmatmul.bf16.gmra.mxu0 %v229
    %v254 = vpop.f32.mrf.mxu0
    %v255 = vadd.f32 0.0, %v254
    %v256 = vpop.f32.mrf.mxu0
    %v257 = vadd.f32 0.0, %v256
    %258 = vdwg.mxu0
    %259 = vmatpush.bf16.msra.mxu0 0
    %260 = vmatpush.bf16.msra.mxu0 0
    %261 = vmatpush.bf16.msra.mxu0 0
    %262 = vmatpush.bf16.msra.mxu0 0
    %263 = vmatpush.bf16.msra.mxu0 0
    %264 = vmatpush.bf16.msra.mxu0 0
    %265 = vmatpush.bf16.msra.mxu0 %v181
    %266 = vmatpush.bf16.msra.mxu0 %v165
    %267 = vmatmul.bf16.gmra.mxu0 %v229
    %v268 = vpop.f32.mrf.mxu0
    %v269 = vadd.f32 0.0, %v268
    %v270 = vpop.f32.mrf.mxu0
    %v271 = vadd.f32 0.0, %v270
    %272 = vdwg.mxu0
    %273 = vmatpush.bf16.msra.mxu0 0
    %274 = vmatpush.bf16.msra.mxu0 0
    %275 = vmatpush.bf16.msra.mxu0 0
    %276 = vmatpush.bf16.msra.mxu0 0
    %277 = vmatpush.bf16.msra.mxu0 0
    %278 = vmatpush.bf16.msra.mxu0 0
    %279 = vmatpush.bf16.msra.mxu0 %v182
    %280 = vmatpush.bf16.msra.mxu0 %v166
    %281 = vmatmul.bf16.gmra.mxu0 %v229
    %v282 = vpop.f32.mrf.mxu0
    %v283 = vadd.f32 0.0, %v282
    %v284 = vpop.f32.mrf.mxu0
    %v285 = vadd.f32 0.0, %v284
    %286 = vdwg.mxu0
    %287 = vmatpush.bf16.msra.mxu0 0
    %288 = vmatpush.bf16.msra.mxu0 0
    %289 = vmatpush.bf16.msra.mxu0 0
    %290 = vmatpush.bf16.msra.mxu0 0
    %291 = vmatpush.bf16.msra.mxu0 0
    %292 = vmatpush.bf16.msra.mxu0 0
    %293 = vmatpush.bf16.msra.mxu0 %v183
    %294 = vmatpush.bf16.msra.mxu0 %v167
    %295 = vmatmul.bf16.gmra.mxu0 %v229
    %v296 = vpop.f32.mrf.mxu0
    %v297 = vadd.f32 0.0, %v296
    %v298 = vpop.f32.mrf.mxu0
    %v299 = vadd.f32 0.0, %v298
    %300 = vdwg.mxu0
    %301 = vmatpush.bf16.msra.mxu0 0
    %302 = vmatpush.bf16.msra.mxu0 0
    %303 = vmatpush.bf16.msra.mxu0 0
    %304 = vmatpush.bf16.msra.mxu0 0
    %305 = vmatpush.bf16.msra.mxu0 0
    %306 = vmatpush.bf16.msra.mxu0 0
    %307 = vmatpush.bf16.msra.mxu0 %v184
    %308 = vmatpush.bf16.msra.mxu0 %v168
    %309 = vmatmul.bf16.gmra.mxu0 %v229
    %v310 = vpop.f32.mrf.mxu0
    %v311 = vadd.f32 0.0, %v310
    %v312 = vpop.f32.mrf.mxu0
    %v313 = vadd.f32 0.0, %v312
    %314 = vdwg.mxu0
    %315 = vmatpush.bf16.msra.mxu0 0
    %316 = vmatpush.bf16.msra.mxu0 0
    %317 = vmatpush.bf16.msra.mxu0 0
    %318 = vmatpush.bf16.msra.mxu0 0
    %319 = vmatpush.bf16.msra.mxu0 0
    %320 = vmatpush.bf16.msra.mxu0 0
    %321 = vmatpush.bf16.msra.mxu0 %v185
    %322 = vmatpush.bf16.msra.mxu0 %v169
    %323 = vmatmul.bf16.gmra.mxu0 %v229
    %v324 = vpop.f32.mrf.mxu0
    %v325 = vadd.f32 0.0, %v324
    %v326 = vpop.f32.mrf.mxu0
    %v327 = vadd.f32 0.0, %v326
    %328 = vdwg.mxu0
    %329 = vmatpush.bf16.msra.mxu0 0
    %330 = vmatpush.bf16.msra.mxu0 0
    %331 = vmatpush.bf16.msra.mxu0 0
    %332 = vmatpush.bf16.msra.mxu0 0
    %333 = vmatpush.bf16.msra.mxu0 0
    %334 = vmatpush.bf16.msra.mxu0 0
    %335 = vmatpush.bf16.msra.mxu0 %v186
    %336 = vmatpush.bf16.msra.mxu0 %v170
    %337 = vmatmul.bf16.gmra.mxu0 %v229
    %v338 = vpop.f32.mrf.mxu0
    %v339 = vadd.f32 0.0, %v338
    %v340 = vpop.f32.mrf.mxu0
    %v341 = vadd.f32 0.0, %v340
    %342 = vdwg.mxu0
    %343 = vmatpush.bf16.msra.mxu0 0
    %344 = vmatpush.bf16.msra.mxu0 0
    %345 = vmatpush.bf16.msra.mxu0 0
    %346 = vmatpush.bf16.msra.mxu0 0
    %347 = vmatpush.bf16.msra.mxu0 0
    %348 = vmatpush.bf16.msra.mxu0 0
    %349 = vmatpush.bf16.msra.mxu0 %v187
    %350 = vmatpush.bf16.msra.mxu0 %v171
    %351 = vmatmul.bf16.gmra.mxu0 %v229
    %v352 = vpop.f32.mrf.mxu0
    %v353 = vadd.f32 0.0, %v352
    %v354 = vpop.f32.mrf.mxu0
    %v355 = vadd.f32 0.0, %v354
    %356 = vdwg.mxu0
    %357 = vmatpush.bf16.msra.mxu0 0
    %358 = vmatpush.bf16.msra.mxu0 0
    %359 = vmatpush.bf16.msra.mxu0 0
    %360 = vmatpush.bf16.msra.mxu0 0
    %361 = vmatpush.bf16.msra.mxu0 0
    %362 = vmatpush.bf16.msra.mxu0 0
    %363 = vmatpush.bf16.msra.mxu0 %v188
    %364 = vmatpush.bf16.msra.mxu0 %v172
    %365 = vmatmul.bf16.gmra.mxu0 %v229
    %v366 = vpop.f32.mrf.mxu0
    %v367 = vadd.f32 0.0, %v366
    %v368 = vpop.f32.mrf.mxu0
    %v369 = vadd.f32 0.0, %v368
    %370 = vdwg.mxu0
    %371 = vmatpush.bf16.msra.mxu0 0
    %372 = vmatpush.bf16.msra.mxu0 0
    %373 = vmatpush.bf16.msra.mxu0 0
    %374 = vmatpush.bf16.msra.mxu0 0
    %375 = vmatpush.bf16.msra.mxu0 0
    %376 = vmatpush.bf16.msra.mxu0 0
    %377 = vmatpush.bf16.msra.mxu0 %v189
    %378 = vmatpush.bf16.msra.mxu0 %v173
    %379 = vmatmul.bf16.gmra.mxu0 %v229
    %v380 = vpop.f32.mrf.mxu0
    %v381 = vadd.f32 0.0, %v380
    %v382 = vpop.f32.mrf.mxu0
    %v383 = vadd.f32 0.0, %v382
    %384 = vdwg.mxu0
    %385 = vmatpush.bf16.msra.mxu0 0
    %386 = vmatpush.bf16.msra.mxu0 0
    %387 = vmatpush.bf16.msra.mxu0 0
    %388 = vmatpush.bf16.msra.mxu0 0
    %389 = vmatpush.bf16.msra.mxu0 0
    %390 = vmatpush.bf16.msra.mxu0 0
    %391 = vmatpush.bf16.msra.mxu0 %v190
    %392 = vmatpush.bf16.msra.mxu0 %v174
    %393 = vmatmul.bf16.gmra.mxu0 %v229
    %v394 = vpop.f32.mrf.mxu0
    %v395 = vadd.f32 0.0, %v394
    %v396 = vpop.f32.mrf.mxu0
    %v397 = vadd.f32 0.0, %v396
    %398 = vdwg.mxu0
    %399 = vmatpush.bf16.msra.mxu0 0
    %400 = vmatpush.bf16.msra.mxu0 0
    %401 = vmatpush.bf16.msra.mxu0 0
    %402 = vmatpush.bf16.msra.mxu0 0
    %403 = vmatpush.bf16.msra.mxu0 0
    %404 = vmatpush.bf16.msra.mxu0 0
    %405 = vmatpush.bf16.msra.mxu0 %v191
    %406 = vmatpush.bf16.msra.mxu0 %v175
    %407 = vmatmul.bf16.gmra.mxu0 %v229
    %v408 = vpop.f32.mrf.mxu0
    %v409 = vadd.f32 0.0, %v408
    %v410 = vpop.f32.mrf.mxu0
    %v411 = vadd.f32 0.0, %v410
    %412 = vdwg.mxu0
    %413 = vmatpush.bf16.msra.mxu0 0
    %414 = vmatpush.bf16.msra.mxu0 0
    %415 = vmatpush.bf16.msra.mxu0 0
    %416 = vmatpush.bf16.msra.mxu0 0
    %417 = vmatpush.bf16.msra.mxu0 0
    %418 = vmatpush.bf16.msra.mxu0 0
    %419 = vmatpush.bf16.msra.mxu0 %v192
    %420 = vmatpush.bf16.msra.mxu0 %v176
    %421 = vmatmul.bf16.gmra.mxu0 %v229
    %v422 = vpop.f32.mrf.mxu0
    %v423 = vadd.f32 0.0, %v422
    %v424 = vpop.f32.mrf.mxu0
    %v425 = vadd.f32 0.0, %v424
    %426 = vdwg.mxu0
    %427 = vmatpush.bf16.msra.mxu0 0
    %428 = vmatpush.bf16.msra.mxu0 0
    %429 = vmatpush.bf16.msra.mxu0 0
    %430 = vmatpush.bf16.msra.mxu0 0
    %431 = vmatpush.bf16.msra.mxu0 0
    %432 = vmatpush.bf16.msra.mxu0 0
    %433 = vmatpush.bf16.msra.mxu0 %v193
    %434 = vmatpush.bf16.msra.mxu0 %v177
    %435 = vmatmul.bf16.gmra.mxu0 %v229
    %v436 = vpop.f32.mrf.mxu0
    %v437 = vadd.f32 0.0, %v436
    %v438 = vpop.f32.mrf.mxu0
    %v439 = vadd.f32 0.0, %v438
    %440 = vdwg.mxu0
    %441 = vmatpush.bf16.msra.mxu0 0
    %442 = vmatpush.bf16.msra.mxu0 0
    %443 = vmatpush.bf16.msra.mxu0 0
    %444 = vmatpush.bf16.msra.mxu0 0
    %445 = vmatpush.bf16.msra.mxu0 0
    %446 = vmatpush.bf16.msra.mxu0 0
    %447 = vmatpush.bf16.msra.mxu0 %v194
    %448 = vmatpush.bf16.msra.mxu0 %v178
    %449 = vmatmul.bf16.gmra.mxu0 %v229
    %v450 = vpop.f32.mrf.mxu0
    %v451 = vadd.f32 0.0, %v450
    %v452 = vpop.f32.mrf.mxu0
    %v453 = vadd.f32 0.0, %v452
    %454 = vdwg.mxu0
    %v455 = vmax.f32 %v241, %v297
    %v456 = vmax.f32 %v255, %v311
    %v457 = vmax.f32 %v269, %v325
    %v458 = vmax.f32 %v283, %v339
    %v459 = vmax.f32 %v243, %v299
    %v460 = vmax.f32 %v257, %v313
    %v461 = vmax.f32 %v271, %v327
    %v462 = vmax.f32 %v285, %v341
    %v463 = vmax.f32 %v353, %v409
    %v464 = vmax.f32 %v367, %v423
    %v465 = vmax.f32 %v381, %v437
    %v466 = vmax.f32 %v395, %v451
    %v467 = vmax.f32 %v355, %v411
    %v468 = vmax.f32 %v369, %v425
    %v469 = vmax.f32 %v383, %v439
    %v470 = vmax.f32 %v397, %v453
    %v471 = vmax.f32 %v455, %v463
    %v472 = vmax.f32 %v456, %v464
    %v473 = vmax.f32 %v457, %v465
    %v474 = vmax.f32 %v458, %v466
    %v475 = vmax.f32 %v459, %v467
    %v476 = vmax.f32 %v460, %v468
    %v477 = vmax.f32 %v461, %v469
    %v478 = vmax.f32 %v462, %v470
    %v479 = vld [vmem:[%s2] sm:$0xff]
    %v480 = vld [vmem:[%s2 + $0x8] sm:$0xff]
    %482 = vset.pattern.permute.xlu0 0
    %483 = vperm.xlu0 %482, %v479
    %v484 = vpop.permute.xlu0 %483
    %487 = vset.pattern.permute.xlu0 0
    %488 = vperm.xlu0 %487, %v480
    %v489 = vpop.permute.xlu0 %488
    %v491 = vadd.f32 %v471, %v484
    %v492 = vadd.f32 %v472, %v484
    %v493 = vadd.f32 %v473, %v484
    %v494 = vadd.f32 %v474, %v484
    %v495 = vadd.f32 %v475, %v489
    %v496 = vadd.f32 %v476, %v489
    %v497 = vadd.f32 %v477, %v489
    %v498 = vadd.f32 %v478, %v489
    %v499 = vmax.f32 %v491, 0.0
    %v500 = vmax.f32 %v492, 0.0
    %v501 = vmax.f32 %v493, 0.0
    %v502 = vmax.f32 %v494, 0.0
    %v503 = vmax.f32 %v495, 0.0
    %v504 = vmax.f32 %v496, 0.0
    %v505 = vmax.f32 %v497, 0.0
    %v506 = vmax.f32 %v498, 0.0
    %v509 = vrot.slane %v500, 7
    %vm510 = vcmask 1040384
    %v511 = vsel %vm510, %v499, %v509
    %v513 = vlaneseq
    %vm514 = vcmp.ge.s32.totalorder %v513, 0
    %vm515 = vcmp.lt.s32.totalorder %v513, 144
    %vm516 = vmand %vm514, %vm515
    %517 = vst.msk [vmem:[#allocation2] ss:$2 sm:$0x3] %vm516, %v511
    %v520 = vrot.slane %v502, 7
    %v521 = vsel %vm510, %v501, %v520
    %s523 = scalar_lea.vmem [#allocation2], 1
    %524 = vst.msk [vmem:[%s523] ss:$2 sm:$0x3] %vm516, %v521
    %525 = vst [vmem:[#allocation1] sm:$0xff] %v499
    %526 = vst [vmem:[#allocation1 + $0x9] sm:$0xff] %v500
    %s527 = scalar_lea.vmem [#allocation1], 1
    %v528 = vld [vmem:[%s527] ss:$9 sm:$0xff]
    %529 = vrot.lane.b32.xlu0 %v528, 16
    %v530 = vpop.permute.xlu0 %529
    %v531 = vrot.slane %v530, 7
    %vm532 = vcmask 130048
    %v533 = vsel %vm532, %v531, %v530
    %vm535 = vcmp.ge.s32.totalorder %v513, 16
    %vm536 = vcmp.lt.s32.totalorder %v513, 160
    %vm537 = vmand %vm535, %vm536
    %s538 = scalar_lea.vmem [#allocation2], 2
    %539 = vst.msk [vmem:[%s538] ss:$2 sm:$0x3] %vm537, %v533
    %540 = vst [vmem:[#allocation1] sm:$0xff] %v501
    %541 = vst [vmem:[#allocation1 + $0x9] sm:$0xff] %v502
    %s542 = scalar_lea.vmem [#allocation1], 1
    %v543 = vld [vmem:[%s542] ss:$9 sm:$0xff]
    %544 = vrot.lane.b32.xlu0 %v543, 16
    %v545 = vpop.permute.xlu0 %544
    %v546 = vrot.slane %v545, 7
    %v547 = vsel %vm532, %v546, %v545
    %s549 = scalar_lea.vmem [#allocation2], 3
    %550 = vst.msk [vmem:[%s549] ss:$2 sm:$0x3] %vm537, %v547
    %551 = vst [vmem:[#allocation1] sm:$0xff] %v499
    %552 = vst [vmem:[#allocation1 + $0x9] sm:$0xff] %v500
    %s553 = scalar_lea.vmem [#allocation1], 2
    %v554 = vld [vmem:[%s553] ss:$9 sm:$0xff]
    %555 = vrot.lane.b32.xlu0 %v554, 32
    %v556 = vpop.permute.xlu0 %555
    %v557 = vrot.slane %v556, 7
    %v558 = vsel %vm227, %v557, %v556
    %vm560 = vcmp.ge.s32.totalorder %v513, 32
    %vm561 = vcmp.lt.s32.totalorder %v513, 176
    %vm562 = vmand %vm560, %vm561
    %s563 = scalar_lea.vmem [#allocation2], 4
    %564 = vst.msk [vmem:[%s563] ss:$2 sm:$0x3] %vm562, %v558
    %565 = vst [vmem:[#allocation1] sm:$0xff] %v501
    %566 = vst [vmem:[#allocation1 + $0x9] sm:$0xff] %v502
    %s567 = scalar_lea.vmem [#allocation1], 2
    %v568 = vld [vmem:[%s567] ss:$9 sm:$0xff]
    %569 = vrot.lane.b32.xlu0 %v568, 32
    %v570 = vpop.permute.xlu0 %569
    %v571 = vrot.slane %v570, 7
    %v572 = vsel %vm227, %v571, %v570
    %s574 = scalar_lea.vmem [#allocation2], 5
    %575 = vst.msk [vmem:[%s574] ss:$2 sm:$0x3] %vm562, %v572
    %576 = vst [vmem:[#allocation1] sm:$0xff] %v499
    %577 = vst [vmem:[#allocation1 + $0x9] sm:$0xff] %v500
    %s578 = scalar_lea.vmem [#allocation1], 3
    %v579 = vld [vmem:[%s578] ss:$9 sm:$0xff]
    %580 = vrot.lane.b32.xlu0 %v579, 48
    %v581 = vpop.permute.xlu0 %580
    %v582 = vrot.slane %v581, 7
    %vm583 = vcmask 392192
    %v584 = vsel %vm583, %v582, %v581
    %vm586 = vcmp.ge.s32.totalorder %v513, 48
    %vm587 = vcmp.lt.s32.totalorder %v513, 192
    %vm588 = vmand %vm586, %vm587
    %s589 = scalar_lea.vmem [#allocation2], 6
    %590 = vst.msk [vmem:[%s589] ss:$2 sm:$0x3] %vm588, %v584
    %591 = vst [vmem:[#allocation1] sm:$0xff] %v501
    %592 = vst [vmem:[#allocation1 + $0x9] sm:$0xff] %v502
    %s593 = scalar_lea.vmem [#allocation1], 3
    %v594 = vld [vmem:[%s593] ss:$9 sm:$0xff]
    %595 = vrot.lane.b32.xlu0 %v594, 48
    %v596 = vpop.permute.xlu0 %595
    %v597 = vrot.slane %v596, 7
    %v598 = vsel %vm583, %v597, %v596
    %s600 = scalar_lea.vmem [#allocation2], 7
    %601 = vst.msk [vmem:[%s600] ss:$2 sm:$0x3] %vm588, %v598
    %602 = vst [vmem:[#allocation1] sm:$0xff] %v499
    %603 = vst [vmem:[#allocation1 + $0x9] sm:$0xff] %v500
    %s604 = scalar_lea.vmem [#allocation1], 4
    %v605 = vld [vmem:[%s604] ss:$9 sm:$0xff]
    %606 = vrot.lane.b32.xlu0 %v605, 64
    %v607 = vpop.permute.xlu0 %606
    %v608 = vrot.slane %v607, 7
    %vm609 = vcmask 523264
    %v610 = vsel %vm609, %v608, %v607
    %vm612 = vcmp.ge.s32.totalorder %v513, 64
    %vm613 = vcmp.lt.s32.totalorder %v513, 208
    %vm614 = vmand %vm612, %vm613
    %s615 = scalar_lea.vmem [#allocation2], 8
    %616 = vst.msk [vmem:[%s615] ss:$2 sm:$0x3] %vm614, %v610
    %617 = vst [vmem:[#allocation1] sm:$0xff] %v501
    %618 = vst [vmem:[#allocation1 + $0x9] sm:$0xff] %v502
    %s619 = scalar_lea.vmem [#allocation1], 4
    %v620 = vld [vmem:[%s619] ss:$9 sm:$0xff]
    %621 = vrot.lane.b32.xlu0 %v620, 64
    %v622 = vpop.permute.xlu0 %621
    %v623 = vrot.slane %v622, 7
    %v624 = vsel %vm609, %v623, %v622
    %s626 = scalar_lea.vmem [#allocation2], 9
    %627 = vst.msk [vmem:[%s626] ss:$2 sm:$0x3] %vm614, %v624
    %628 = vst [vmem:[#allocation1] sm:$0xff] %v499
    %629 = vst [vmem:[#allocation1 + $0x9] sm:$0xff] %v500
    %s630 = scalar_lea.vmem [#allocation1], 5
    %v631 = vld [vmem:[%s630] ss:$9 sm:$0xff]
    %632 = vrot.lane.b32.xlu0 %v631, 80
    %v633 = vpop.permute.xlu0 %632
    %v634 = vrot.slane %v633, 7
    %vm635 = vcmask 654336
    %v636 = vsel %vm635, %v634, %v633
    %vm638 = vcmp.ge.s32.totalorder %v513, 80
    %vm639 = vcmp.lt.s32.totalorder %v513, 224
    %vm640 = vmand %vm638, %vm639
    %s641 = scalar_lea.vmem [#allocation2], 10
    %642 = vst.msk [vmem:[%s641] ss:$2 sm:$0x3] %vm640, %v636
    %643 = vst [vmem:[#allocation1] sm:$0xff] %v501
    %644 = vst [vmem:[#allocation1 + $0x9] sm:$0xff] %v502
    %s645 = scalar_lea.vmem [#allocation1], 5
    %v646 = vld [vmem:[%s645] ss:$9 sm:$0xff]
    %647 = vrot.lane.b32.xlu0 %v646, 80
    %v648 = vpop.permute.xlu0 %647
    %v649 = vrot.slane %v648, 7
    %v650 = vsel %vm635, %v649, %v648
    %s652 = scalar_lea.vmem [#allocation2], 11
    %653 = vst.msk [vmem:[%s652] ss:$2 sm:$0x3] %vm640, %v650
    %654 = vst [vmem:[#allocation1] sm:$0xff] %v499
    %655 = vst [vmem:[#allocation1 + $0x9] sm:$0xff] %v500
    %s656 = scalar_lea.vmem [#allocation1], 6
    %v657 = vld [vmem:[%s656] ss:$9 sm:$0xff]
    %658 = vrot.lane.b32.xlu0 %v657, 96
    %v659 = vpop.permute.xlu0 %658
    %v660 = vrot.slane %v659, 7
    %vm661 = vcmask 785408
    %v662 = vsel %vm661, %v660, %v659
    %vm664 = vcmp.ge.s32.totalorder %v513, 96
    %vm665 = vcmp.lt.s32.totalorder %v513, 240
    %vm666 = vmand %vm664, %vm665
    %s667 = scalar_lea.vmem [#allocation2], 12
    %668 = vst.msk [vmem:[%s667] ss:$2 sm:$0x3] %vm666, %v662
    %669 = vst [vmem:[#allocation1] sm:$0xff] %v501
    %670 = vst [vmem:[#allocation1 + $0x9] sm:$0xff] %v502
    %s671 = scalar_lea.vmem [#allocation1], 6
    %v672 = vld [vmem:[%s671] ss:$9 sm:$0xff]
    %673 = vrot.lane.b32.xlu0 %v672, 96
    %v674 = vpop.permute.xlu0 %673
    %v675 = vrot.slane %v674, 7
    %v676 = vsel %vm661, %v675, %v674
    %s678 = scalar_lea.vmem [#allocation2], 13
    %679 = vst.msk [vmem:[%s678] ss:$2 sm:$0x3] %vm666, %v676
    %680 = vst [vmem:[#allocation1] sm:$0xff] %v499
    %681 = vst [vmem:[#allocation1 + $0x9] sm:$0xff] %v500
    %s682 = scalar_lea.vmem [#allocation1], 7
    %v683 = vld [vmem:[%s682] ss:$9 sm:$0xff]
    %684 = vrot.lane.b32.xlu0 %v683, 112
    %v685 = vpop.permute.xlu0 %684
    %v686 = vrot.slane %v685, 7
    %vm687 = vcmask 916480
    %v688 = vsel %vm687, %v686, %v685
    %vm690 = vcmp.ge.s32.totalorder %v513, 112
    %vm691 = vcmp.lt.s32.totalorder %v513, 256
    %vm692 = vmand %vm690, %vm691
    %s693 = scalar_lea.vmem [#allocation2], 14
    %694 = vst.msk [vmem:[%s693] ss:$2 sm:$0x3] %vm692, %v688
    %695 = vst [vmem:[#allocation1] sm:$0xff] %v501
    %696 = vst [vmem:[#allocation1 + $0x9] sm:$0xff] %v502
    %s697 = scalar_lea.vmem [#allocation1], 7
    %v698 = vld [vmem:[%s697] ss:$9 sm:$0xff]
    %699 = vrot.lane.b32.xlu0 %v698, 112
    %v700 = vpop.permute.xlu0 %699
    %v701 = vrot.slane %v700, 7
    %v702 = vsel %vm687, %v701, %v700
    %s704 = scalar_lea.vmem [#allocation2], 15
    %705 = vst.msk [vmem:[%s704] ss:$2 sm:$0x3] %vm692, %v702
    %v708 = vrot.slane %v504, 7
    %v709 = vsel %vm510, %v503, %v708
    %s711 = scalar_lea.vmem [#allocation2], 18
    %712 = vst.msk [vmem:[%s711] ss:$2 sm:$0x3] %vm516, %v709
    %v715 = vrot.slane %v506, 7
    %v716 = vsel %vm510, %v505, %v715
    %s718 = scalar_lea.vmem [#allocation2], 19
    %719 = vst.msk [vmem:[%s718] ss:$2 sm:$0x3] %vm516, %v716
    %720 = vst [vmem:[#allocation1] sm:$0xff] %v503
    %721 = vst [vmem:[#allocation1 + $0x9] sm:$0xff] %v504
    %s722 = scalar_lea.vmem [#allocation1], 1
    %v723 = vld [vmem:[%s722] ss:$9 sm:$0xff]
    %724 = vrot.lane.b32.xlu0 %v723, 16
    %v725 = vpop.permute.xlu0 %724
    %v726 = vrot.slane %v725, 7
    %v727 = vsel %vm532, %v726, %v725
    %s729 = scalar_lea.vmem [#allocation2], 20
    %730 = vst.msk [vmem:[%s729] ss:$2 sm:$0x3] %vm537, %v727
    %731 = vst [vmem:[#allocation1] sm:$0xff] %v505
    %732 = vst [vmem:[#allocation1 + $0x9] sm:$0xff] %v506
    %s733 = scalar_lea.vmem [#allocation1], 1
    %v734 = vld [vmem:[%s733] ss:$9 sm:$0xff]
    %735 = vrot.lane.b32.xlu0 %v734, 16
    %v736 = vpop.permute.xlu0 %735
    %v737 = vrot.slane %v736, 7
    %v738 = vsel %vm532, %v737, %v736
    %s740 = scalar_lea.vmem [#allocation2], 21
    %741 = vst.msk [vmem:[%s740] ss:$2 sm:$0x3] %vm537, %v738
    %742 = vst [vmem:[#allocation1] sm:$0xff] %v503
    %743 = vst [vmem:[#allocation1 + $0x9] sm:$0xff] %v504
    %s744 = scalar_lea.vmem [#allocation1], 2
    %v745 = vld [vmem:[%s744] ss:$9 sm:$0xff]
    %746 = vrot.lane.b32.xlu0 %v745, 32
    %v747 = vpop.permute.xlu0 %746
    %v748 = vrot.slane %v747, 7
    %v749 = vsel %vm227, %v748, %v747
    %s751 = scalar_lea.vmem [#allocation2], 22
    %752 = vst.msk [vmem:[%s751] ss:$2 sm:$0x3] %vm562, %v749
    %753 = vst [vmem:[#allocation1] sm:$0xff] %v505
    %754 = vst [vmem:[#allocation1 + $0x9] sm:$0xff] %v506
    %s755 = scalar_lea.vmem [#allocation1], 2
    %v756 = vld [vmem:[%s755] ss:$9 sm:$0xff]
    %757 = vrot.lane.b32.xlu0 %v756, 32
    %v758 = vpop.permute.xlu0 %757
    %v759 = vrot.slane %v758, 7
    %v760 = vsel %vm227, %v759, %v758
    %s762 = scalar_lea.vmem [#allocation2], 23
    %763 = vst.msk [vmem:[%s762] ss:$2 sm:$0x3] %vm562, %v760
    %764 = vst [vmem:[#allocation1] sm:$0xff] %v503
    %765 = vst [vmem:[#allocation1 + $0x9] sm:$0xff] %v504
    %s766 = scalar_lea.vmem [#allocation1], 3
    %v767 = vld [vmem:[%s766] ss:$9 sm:$0xff]
    %768 = vrot.lane.b32.xlu0 %v767, 48
    %v769 = vpop.permute.xlu0 %768
    %v770 = vrot.slane %v769, 7
    %v771 = vsel %vm583, %v770, %v769
    %s773 = scalar_lea.vmem [#allocation2], 24
    %774 = vst.msk [vmem:[%s773] ss:$2 sm:$0x3] %vm588, %v771
    %775 = vst [vmem:[#allocation1] sm:$0xff] %v505
    %776 = vst [vmem:[#allocation1 + $0x9] sm:$0xff] %v506
    %s777 = scalar_lea.vmem [#allocation1], 3
    %v778 = vld [vmem:[%s777] ss:$9 sm:$0xff]
    %779 = vrot.lane.b32.xlu0 %v778, 48
    %v780 = vpop.permute.xlu0 %779
    %v781 = vrot.slane %v780, 7
    %v782 = vsel %vm583, %v781, %v780
    %s784 = scalar_lea.vmem [#allocation2], 25
    %785 = vst.msk [vmem:[%s784] ss:$2 sm:$0x3] %vm588, %v782
    %786 = vst [vmem:[#allocation1] sm:$0xff] %v503
    %787 = vst [vmem:[#allocation1 + $0x9] sm:$0xff] %v504
    %s788 = scalar_lea.vmem [#allocation1], 4
    %v789 = vld [vmem:[%s788] ss:$9 sm:$0xff]
    %790 = vrot.lane.b32.xlu0 %v789, 64
    %v791 = vpop.permute.xlu0 %790
    %v792 = vrot.slane %v791, 7
    %v793 = vsel %vm609, %v792, %v791
    %s795 = scalar_lea.vmem [#allocation2], 26
    %796 = vst.msk [vmem:[%s795] ss:$2 sm:$0x3] %vm614, %v793
    %797 = vst [vmem:[#allocation1] sm:$0xff] %v505
    %798 = vst [vmem:[#allocation1 + $0x9] sm:$0xff] %v506
    %s799 = scalar_lea.vmem [#allocation1], 4
    %v800 = vld [vmem:[%s799] ss:$9 sm:$0xff]
    %801 = vrot.lane.b32.xlu0 %v800, 64
    %v802 = vpop.permute.xlu0 %801
    %v803 = vrot.slane %v802, 7
    %v804 = vsel %vm609, %v803, %v802
    %s806 = scalar_lea.vmem [#allocation2], 27
    %807 = vst.msk [vmem:[%s806] ss:$2 sm:$0x3] %vm614, %v804
    %808 = vst [vmem:[#allocation1] sm:$0xff] %v503
    %809 = vst [vmem:[#allocation1 + $0x9] sm:$0xff] %v504
    %s810 = scalar_lea.vmem [#allocation1], 5
    %v811 = vld [vmem:[%s810] ss:$9 sm:$0xff]
    %812 = vrot.lane.b32.xlu0 %v811, 80
    %v813 = vpop.permute.xlu0 %812
    %v814 = vrot.slane %v813, 7
    %v815 = vsel %vm635, %v814, %v813
    %s817 = scalar_lea.vmem [#allocation2], 28
    %818 = vst.msk [vmem:[%s817] ss:$2 sm:$0x3] %vm640, %v815
    %819 = vst [vmem:[#allocation1] sm:$0xff] %v505
    %820 = vst [vmem:[#allocation1 + $0x9] sm:$0xff] %v506
    %s821 = scalar_lea.vmem [#allocation1], 5
    %v822 = vld [vmem:[%s821] ss:$9 sm:$0xff]
    %823 = vrot.lane.b32.xlu0 %v822, 80
    %v824 = vpop.permute.xlu0 %823
    %v825 = vrot.slane %v824, 7
    %v826 = vsel %vm635, %v825, %v824
    %s828 = scalar_lea.vmem [#allocation2], 29
    %829 = vst.msk [vmem:[%s828] ss:$2 sm:$0x3] %vm640, %v826
    %830 = vst [vmem:[#allocation1] sm:$0xff] %v503
    %831 = vst [vmem:[#allocation1 + $0x9] sm:$0xff] %v504
    %s832 = scalar_lea.vmem [#allocation1], 6
    %v833 = vld [vmem:[%s832] ss:$9 sm:$0xff]
    %834 = vrot.lane.b32.xlu0 %v833, 96
    %v835 = vpop.permute.xlu0 %834
    %v836 = vrot.slane %v835, 7
    %v837 = vsel %vm661, %v836, %v835
    %s839 = scalar_lea.vmem [#allocation2], 30
    %840 = vst.msk [vmem:[%s839] ss:$2 sm:$0x3] %vm666, %v837
    %841 = vst [vmem:[#allocation1] sm:$0xff] %v505
    %842 = vst [vmem:[#allocation1 + $0x9] sm:$0xff] %v506
    %s843 = scalar_lea.vmem [#allocation1], 6
    %v844 = vld [vmem:[%s843] ss:$9 sm:$0xff]
    %845 = vrot.lane.b32.xlu0 %v844, 96
    %v846 = vpop.permute.xlu0 %845
    %v847 = vrot.slane %v846, 7
    %v848 = vsel %vm661, %v847, %v846
    %s850 = scalar_lea.vmem [#allocation2], 31
    %851 = vst.msk [vmem:[%s850] ss:$2 sm:$0x3] %vm666, %v848
    %852 = vst [vmem:[#allocation1] sm:$0xff] %v503
    %853 = vst [vmem:[#allocation1 + $0x9] sm:$0xff] %v504
    %s854 = scalar_lea.vmem [#allocation1], 7
    %v855 = vld [vmem:[%s854] ss:$9 sm:$0xff]
    %856 = vrot.lane.b32.xlu0 %v855, 112
    %v857 = vpop.permute.xlu0 %856
    %v858 = vrot.slane %v857, 7
    %v859 = vsel %vm687, %v858, %v857
    %s861 = scalar_lea.vmem [#allocation2], 32
    %862 = vst.msk [vmem:[%s861] ss:$2 sm:$0x3] %vm692, %v859
    %863 = vst [vmem:[#allocation1] sm:$0xff] %v505
    %864 = vst [vmem:[#allocation1 + $0x9] sm:$0xff] %v506
    %s865 = scalar_lea.vmem [#allocation1], 7
    %v866 = vld [vmem:[%s865] ss:$9 sm:$0xff]
    %867 = vrot.lane.b32.xlu0 %v866, 112
    %v868 = vpop.permute.xlu0 %867
    %v869 = vrot.slane %v868, 7
    %v870 = vsel %vm687, %v869, %v868
    %s872 = scalar_lea.vmem [#allocation2], 33
    %873 = vst.msk [vmem:[%s872] ss:$2 sm:$0x3] %vm692, %v870
    %v874 = vld [vmem:[#allocation2] sm:$0xff]
    %v875 = vld [vmem:[#allocation2 + $0x8] sm:$0xff]
    %v876 = vld [vmem:[#allocation2 + $0x10] sm:$0xff]
    %v877 = vld [vmem:[#allocation2 + $0x18] sm:$0xff]
    %v878 = vld [vmem:[#allocation2 + $0x20] sm:$0xf]
    %884 = vst [vmem:[#allocation1] ss:$4 sm:$0xff] %v874
    %s885 = scalar_lea.vmem [#allocation1], 32
    %886 = vst [vmem:[%s885] ss:$4 sm:$0xff] %v875
    %v887 = vld.sshfl [vmem:[#allocation1] sm:$0xff pattern:$0x73625140]
    %v888 = vld.sshfl [vmem:[#allocation1 + $0x8] sm:$0xff pattern:$0x73625140]
    %v889 = vld.sshfl [vmem:[#allocation1 + $0x10] sm:$0xff pattern:$0x73625140]
    %v890 = vld.sshfl [vmem:[#allocation1 + $0x18] sm:$0xff pattern:$0x73625140]
    %v891 = vld.sshfl [vmem:[#allocation1 + $0x20] sm:$0xff pattern:$0x73625140]
    %v892 = vld.sshfl [vmem:[#allocation1 + $0x28] sm:$0xff pattern:$0x73625140]
    %v893 = vld.sshfl [vmem:[#allocation1 + $0x30] sm:$0xff pattern:$0x73625140]
    %v894 = vld.sshfl [vmem:[#allocation1 + $0x38] sm:$0xff pattern:$0x73625140]
    %895 = vst [vmem:[#allocation1] ss:$4 sm:$0xff] %v876
    %896 = vst [vmem:[%s885] ss:$4 sm:$0xff] %v877
    %v897 = vld.sshfl [vmem:[#allocation1] sm:$0xff pattern:$0x73625140]
    %v898 = vld.sshfl [vmem:[#allocation1 + $0x8] sm:$0xff pattern:$0x73625140]
    %v899 = vld.sshfl [vmem:[#allocation1 + $0x10] sm:$0xff pattern:$0x73625140]
    %v900 = vld.sshfl [vmem:[#allocation1 + $0x18] sm:$0xff pattern:$0x73625140]
    %v901 = vld.sshfl [vmem:[#allocation1 + $0x20] sm:$0xff pattern:$0x73625140]
    %v902 = vld.sshfl [vmem:[#allocation1 + $0x28] sm:$0xff pattern:$0x73625140]
    %v903 = vld.sshfl [vmem:[#allocation1 + $0x30] sm:$0xff pattern:$0x73625140]
    %v904 = vld.sshfl [vmem:[#allocation1 + $0x38] sm:$0xff pattern:$0x73625140]
    %905 = vst [vmem:[#allocation1] ss:$4 sm:$0xff] %v878
    %v906 = vld.sshfl [vmem:[#allocation1] sm:$0xff pattern:$0x73625140]
    %v907 = vld.sshfl [vmem:[#allocation1 + $0x8] sm:$0xff pattern:$0x73625140]
    %v926 = vpack.c.bf16 %v887, %v887
    %v927 = vpack.c.bf16 %v888, %v888
    %v928 = vpack.c.bf16 %v889, %v889
    %v929 = vpack.c.bf16 %v890, %v890
    %v930 = vpack.c.bf16 %v891, %v891
    %v931 = vpack.c.bf16 %v892, %v892
    %v932 = vpack.c.bf16 %v893, %v893
    %v933 = vpack.c.bf16 %v894, %v894
    %v934 = vpack.c.bf16 %v897, %v897
    %v935 = vpack.c.bf16 %v898, %v898
    %v936 = vpack.c.bf16 %v899, %v899
    %v937 = vpack.c.bf16 %v900, %v900
    %v938 = vpack.c.bf16 %v901, %v901
    %v939 = vpack.c.bf16 %v902, %v902
    %v940 = vpack.c.bf16 %v903, %v903
    %v941 = vpack.c.bf16 %v904, %v904
    %v942 = vpack.c.bf16 %v906, %v906
    %v943 = vpack.c.bf16 %v907, %v907
    %v944 = vld [vmem:[%s3] sm:$0xf]
    %v945 = vld [vmem:[%s3 + $0x4] sm:$0xf]
    %v946 = vld [vmem:[%s3 + $0x8] sm:$0xf]
    %v947 = vld [vmem:[%s3 + $0xc] sm:$0xf]
    %v948 = vld [vmem:[%s3 + $0x10] sm:$0xf]
    %v949 = vld [vmem:[%s3 + $0x14] sm:$0xf]
    %v950 = vld [vmem:[%s3 + $0x18] sm:$0xf]
    %v951 = vld [vmem:[%s3 + $0x1c] sm:$0xf]
    %v952 = vld [vmem:[%s3 + $0x20] sm:$0xf]
    %v953 = vld [vmem:[%s3 + $0x24] sm:$0xf]
    %v954 = vld [vmem:[%s3 + $0x28] sm:$0xf]
    %v955 = vld [vmem:[%s3 + $0x2c] sm:$0xf]
    %v956 = vld [vmem:[%s3 + $0x30] sm:$0xf]
    %v957 = vld [vmem:[%s3 + $0x34] sm:$0xf]
    %v958 = vld [vmem:[%s3 + $0x38] sm:$0xf]
    %v959 = vld [vmem:[%s3 + $0x3c] sm:$0xf]
    %v960 = vld [vmem:[%s3 + $0x40] sm:$0xf]
    %v961 = vld [vmem:[%s3 + $0x44] sm:$0xf]
    %v962 = vld [vmem:[%s3 + $0x48] sm:$0xf]
    %v963 = vld [vmem:[%s3 + $0x4c] sm:$0xf]
    %v964 = vld [vmem:[%s3 + $0x50] sm:$0xf]
    %v965 = vld [vmem:[%s3 + $0x54] sm:$0xf]
    %v966 = vld [vmem:[%s3 + $0x58] sm:$0xf]
    %v967 = vld [vmem:[%s3 + $0x5c] sm:$0xf]
    %v968 = vld [vmem:[%s3 + $0x60] sm:$0xf]
    %v969 = vld [vmem:[%s3 + $0x64] sm:$0xf]
    %v970 = vld [vmem:[%s3 + $0x68] sm:$0xf]
    %v971 = vld [vmem:[%s3 + $0x6c] sm:$0xf]
    %v972 = vld [vmem:[%s3 + $0x70] sm:$0xf]
    %v973 = vld [vmem:[%s3 + $0x74] sm:$0xf]
    %v974 = vld [vmem:[%s3 + $0x78] sm:$0xf]
    %v975 = vld [vmem:[%s3 + $0x7c] sm:$0xf]
    %v976 = vld [vmem:[%s3 + $0x80] sm:$0xf]
    %v977 = vld [vmem:[%s3 + $0x84] sm:$0xf]
    %v978 = vld [vmem:[%s3 + $0x88] sm:$0xf]
    %v979 = vld [vmem:[%s3 + $0x8c] sm:$0xf]
    %v980 = vld [vmem:[%s3 + $0x90] sm:$0xf]
    %v981 = vld [vmem:[%s3 + $0x94] sm:$0xf]
    %v982 = vld [vmem:[%s3 + $0x98] sm:$0xf]
    %v983 = vld [vmem:[%s3 + $0x9c] sm:$0xf]
    %v984 = vld [vmem:[%s3 + $0xa0] sm:$0xf]
    %v985 = vld [vmem:[%s3 + $0xa4] sm:$0xf]
    %v986 = vld [vmem:[%s3 + $0xa8] sm:$0xf]
    %v987 = vld [vmem:[%s3 + $0xac] sm:$0xf]
    %v988 = vld [vmem:[%s3 + $0xb0] sm:$0xf]
    %v989 = vld [vmem:[%s3 + $0xb4] sm:$0xf]
    %v990 = vld [vmem:[%s3 + $0xb8] sm:$0xf]
    %v991 = vld [vmem:[%s3 + $0xbc] sm:$0xf]
    %v992 = vld [vmem:[%s3 + $0xc0] sm:$0xf]
    %v993 = vld [vmem:[%s3 + $0xc4] sm:$0xf]
    %v994 = vld [vmem:[%s3 + $0xc8] sm:$0xf]
    %v995 = vld [vmem:[%s3 + $0xcc] sm:$0xf]
    %v996 = vld [vmem:[%s3 + $0xd0] sm:$0xf]
    %v997 = vld [vmem:[%s3 + $0xd4] sm:$0xf]
    %v998 = vld [vmem:[%s3 + $0xd8] sm:$0xf]
    %v999 = vld [vmem:[%s3 + $0xdc] sm:$0xf]
    %v1000 = vld [vmem:[%s3 + $0xe0] sm:$0xf]
    %v1001 = vld [vmem:[%s3 + $0xe4] sm:$0xf]
    %v1002 = vld [vmem:[%s3 + $0xe8] sm:$0xf]
    %v1003 = vld [vmem:[%s3 + $0xec] sm:$0xf]
    %v1004 = vld [vmem:[%s3 + $0xf0] sm:$0xf]
    %v1005 = vld [vmem:[%s3 + $0xf4] sm:$0xf]
    %v1006 = vld [vmem:[%s3 + $0xf8] sm:$0xf]
    %v1007 = vld [vmem:[%s3 + $0xfc] sm:$0xf]
    %v1008 = vld [vmem:[%s3 + $0x100] sm:$0xf]
    %v1009 = vld [vmem:[%s3 + $0x104] sm:$0xf]
    %v1010 = vld [vmem:[%s3 + $0x108] sm:$0xf]
    %v1011 = vld [vmem:[%s3 + $0x10c] sm:$0xf]
    %v1012 = vld [vmem:[%s3 + $0x110] sm:$0xf]
    %v1013 = vld [vmem:[%s3 + $0x114] sm:$0xf]
    %v1014 = vld [vmem:[%s3 + $0x118] sm:$0xf]
    %v1015 = vld [vmem:[%s3 + $0x11c] sm:$0xf]
    %v1016 = vld [vmem:[%s3 + $0x120] sm:$0xf]
    %v1017 = vld [vmem:[%s3 + $0x124] sm:$0xf]
    %v1018 = vld [vmem:[%s3 + $0x128] sm:$0xf]
    %v1019 = vld [vmem:[%s3 + $0x12c] sm:$0xf]
    %v1020 = vld [vmem:[%s3 + $0x130] sm:$0xf]
    %v1021 = vld [vmem:[%s3 + $0x134] sm:$0xf]
    %v1022 = vld [vmem:[%s3 + $0x138] sm:$0xf]
    %v1023 = vld [vmem:[%s3 + $0x13c] sm:$0xf]
    %v1024 = vld [vmem:[%s3 + $0x140] sm:$0xf]
    %v1025 = vld [vmem:[%s3 + $0x144] sm:$0xf]
    %v1026 = vld [vmem:[%s3 + $0x148] sm:$0xf]
    %v1027 = vld [vmem:[%s3 + $0x14c] sm:$0xf]
    %v1028 = vld [vmem:[%s3 + $0x150] sm:$0xf]
    %v1029 = vld [vmem:[%s3 + $0x154] sm:$0xf]
    %v1030 = vld [vmem:[%s3 + $0x158] sm:$0xf]
    %v1031 = vld [vmem:[%s3 + $0x15c] sm:$0xf]
    %v1032 = vld [vmem:[%s3 + $0x160] sm:$0xf]
    %v1033 = vld [vmem:[%s3 + $0x164] sm:$0xf]
    %v1034 = vld [vmem:[%s3 + $0x168] sm:$0xf]
    %v1035 = vld [vmem:[%s3 + $0x16c] sm:$0xf]
    %v1036 = vld [vmem:[%s3 + $0x170] sm:$0xf]
    %v1037 = vld [vmem:[%s3 + $0x174] sm:$0xf]
    %v1038 = vld [vmem:[%s3 + $0x178] sm:$0xf]
    %v1039 = vld [vmem:[%s3 + $0x17c] sm:$0xf]
    %v1040 = vld [vmem:[%s3 + $0x180] sm:$0xf]
    %v1041 = vld [vmem:[%s3 + $0x184] sm:$0xf]
    %v1042 = vld [vmem:[%s3 + $0x188] sm:$0xf]
    %v1043 = vld [vmem:[%s3 + $0x18c] sm:$0xf]
    %v1044 = vld [vmem:[%s3 + $0x190] sm:$0xf]
    %v1045 = vld [vmem:[%s3 + $0x194] sm:$0xf]
    %v1046 = vld [vmem:[%s3 + $0x198] sm:$0xf]
    %v1047 = vld [vmem:[%s3 + $0x19c] sm:$0xf]
    %v1048 = vld [vmem:[%s3 + $0x1a0] sm:$0xf]
    %v1049 = vld [vmem:[%s3 + $0x1a4] sm:$0xf]
    %v1050 = vld [vmem:[%s3 + $0x1a8] sm:$0xf]
    %v1051 = vld [vmem:[%s3 + $0x1ac] sm:$0xf]
    %v1052 = vld [vmem:[%s3 + $0x1b0] sm:$0xf]
    %v1053 = vld [vmem:[%s3 + $0x1b4] sm:$0xf]
    %v1054 = vld [vmem:[%s3 + $0x1b8] sm:$0xf]
    %v1055 = vld [vmem:[%s3 + $0x1bc] sm:$0xf]
    %v1056 = vld [vmem:[%s3 + $0x1c0] sm:$0xf]
    %v1057 = vld [vmem:[%s3 + $0x1c4] sm:$0xf]
    %v1058 = vld [vmem:[%s3 + $0x1c8] sm:$0xf]
    %v1059 = vld [vmem:[%s3 + $0x1cc] sm:$0xf]
    %v1060 = vld [vmem:[%s3 + $0x1d0] sm:$0xf]
    %v1061 = vld [vmem:[%s3 + $0x1d4] sm:$0xf]
    %v1062 = vld [vmem:[%s3 + $0x1d8] sm:$0xf]
    %v1063 = vld [vmem:[%s3 + $0x1dc] sm:$0xf]
    %v1064 = vld [vmem:[%s3 + $0x1e0] sm:$0xf]
    %v1065 = vld [vmem:[%s3 + $0x1e4] sm:$0xf]
    %v1066 = vld [vmem:[%s3 + $0x1e8] sm:$0xf]
    %v1067 = vld [vmem:[%s3 + $0x1ec] sm:$0xf]
    %v1068 = vld [vmem:[%s3 + $0x1f0] sm:$0xf]
    %v1069 = vld [vmem:[%s3 + $0x1f4] sm:$0xf]
    %v1070 = vld [vmem:[%s3 + $0x1f8] sm:$0xf]
    %v1071 = vld [vmem:[%s3 + $0x1fc] sm:$0xf]
    %v1072 = vld [vmem:[%s3 + $0x200] sm:$0xf]
    %v1073 = vld [vmem:[%s3 + $0x204] sm:$0xf]
    %v1074 = vld [vmem:[%s3 + $0x208] sm:$0xf]
    %v1075 = vld [vmem:[%s3 + $0x20c] sm:$0xf]
    %v1076 = vld [vmem:[%s3 + $0x210] sm:$0xf]
    %v1077 = vld [vmem:[%s3 + $0x214] sm:$0xf]
    %v1078 = vld [vmem:[%s3 + $0x218] sm:$0xf]
    %v1079 = vld [vmem:[%s3 + $0x21c] sm:$0xf]
    %v1080 = vld [vmem:[%s3 + $0x220] sm:$0xf]
    %v1081 = vld [vmem:[%s3 + $0x224] sm:$0xf]
    %v1082 = vld [vmem:[%s3 + $0x228] sm:$0xf]
    %v1083 = vld [vmem:[%s3 + $0x22c] sm:$0xf]
    %v1084 = vld [vmem:[%s3 + $0x230] sm:$0xf]
    %v1085 = vld [vmem:[%s3 + $0x234] sm:$0xf]
    %v1086 = vld [vmem:[%s3 + $0x238] sm:$0xf]
    %v1087 = vld [vmem:[%s3 + $0x23c] sm:$0xf]
    %v1088 = vld [vmem:[%s3 + $0x240] sm:$0xf]
    %v1089 = vld [vmem:[%s3 + $0x244] sm:$0xf]
    %v1090 = vld [vmem:[%s3 + $0x248] sm:$0xf]
    %v1091 = vld [vmem:[%s3 + $0x24c] sm:$0xf]
    %v1092 = vld [vmem:[%s3 + $0x250] sm:$0xf]
    %v1093 = vld [vmem:[%s3 + $0x254] sm:$0xf]
    %v1094 = vld [vmem:[%s3 + $0x258] sm:$0xf]
    %v1095 = vld [vmem:[%s3 + $0x25c] sm:$0xf]
    %v1096 = vld [vmem:[%s3 + $0x260] sm:$0xf]
    %v1097 = vld [vmem:[%s3 + $0x264] sm:$0xf]
    %v1098 = vld [vmem:[%s3 + $0x268] sm:$0xf]
    %v1099 = vld [vmem:[%s3 + $0x26c] sm:$0xf]
    %v1100 = vld [vmem:[%s3 + $0x270] sm:$0xf]
    %v1101 = vld [vmem:[%s3 + $0x274] sm:$0xf]
    %v1102 = vld [vmem:[%s3 + $0x278] sm:$0xf]
    %v1103 = vld [vmem:[%s3 + $0x27c] sm:$0xf]
    %v1104 = vld [vmem:[%s3 + $0x280] sm:$0xf]
    %v1105 = vld [vmem:[%s3 + $0x284] sm:$0xf]
    %v1106 = vld [vmem:[%s3 + $0x288] sm:$0xf]
    %v1107 = vld [vmem:[%s3 + $0x28c] sm:$0xf]
    %v1108 = vld [vmem:[%s3 + $0x290] sm:$0xf]
    %v1109 = vld [vmem:[%s3 + $0x294] sm:$0xf]
    %v1110 = vld [vmem:[%s3 + $0x298] sm:$0xf]
    %v1111 = vld [vmem:[%s3 + $0x29c] sm:$0xf]
    %v1112 = vld [vmem:[%s3 + $0x2a0] sm:$0xf]
    %v1113 = vld [vmem:[%s3 + $0x2a4] sm:$0xf]
    %v1114 = vld [vmem:[%s3 + $0x2a8] sm:$0xf]
    %v1115 = vld [vmem:[%s3 + $0x2ac] sm:$0xf]
    %v1116 = vld [vmem:[%s3 + $0x2b0] sm:$0xf]
    %v1117 = vld [vmem:[%s3 + $0x2b4] sm:$0xf]
    %v1118 = vld [vmem:[%s3 + $0x2b8] sm:$0xf]
    %v1119 = vld [vmem:[%s3 + $0x2bc] sm:$0xf]
    %v1120 = vld [vmem:[%s3 + $0x2c0] sm:$0xf]
    %v1121 = vld [vmem:[%s3 + $0x2c4] sm:$0xf]
    %v1122 = vld [vmem:[%s3 + $0x2c8] sm:$0xf]
    %v1123 = vld [vmem:[%s3 + $0x2cc] sm:$0xf]
    %v1124 = vld [vmem:[%s3 + $0x2d0] sm:$0xf]
    %v1125 = vld [vmem:[%s3 + $0x2d4] sm:$0xf]
    %v1126 = vld [vmem:[%s3 + $0x2d8] sm:$0xf]
    %v1127 = vld [vmem:[%s3 + $0x2dc] sm:$0xf]
    %v1128 = vld [vmem:[%s3 + $0x2e0] sm:$0xf]
    %v1129 = vld [vmem:[%s3 + $0x2e4] sm:$0xf]
    %v1130 = vld [vmem:[%s3 + $0x2e8] sm:$0xf]
    %v1131 = vld [vmem:[%s3 + $0x2ec] sm:$0xf]
    %v1132 = vld [vmem:[%s3 + $0x2f0] sm:$0xf]
    %v1133 = vld [vmem:[%s3 + $0x2f4] sm:$0xf]
    %v1134 = vld [vmem:[%s3 + $0x2f8] sm:$0xf]
    %v1135 = vld [vmem:[%s3 + $0x2fc] sm:$0xf]
    %v1136 = vld [vmem:[%s3 + $0x300] sm:$0xf]
    %v1137 = vld [vmem:[%s3 + $0x304] sm:$0xf]
    %v1138 = vld [vmem:[%s3 + $0x308] sm:$0xf]
    %v1139 = vld [vmem:[%s3 + $0x30c] sm:$0xf]
    %v1140 = vld [vmem:[%s3 + $0x310] sm:$0xf]
    %v1141 = vld [vmem:[%s3 + $0x314] sm:$0xf]
    %v1142 = vld [vmem:[%s3 + $0x318] sm:$0xf]
    %v1143 = vld [vmem:[%s3 + $0x31c] sm:$0xf]
    %v1144 = vld [vmem:[%s3 + $0x320] sm:$0xf]
    %v1145 = vld [vmem:[%s3 + $0x324] sm:$0xf]
    %v1146 = vld [vmem:[%s3 + $0x328] sm:$0xf]
    %v1147 = vld [vmem:[%s3 + $0x32c] sm:$0xf]
    %v1148 = vld [vmem:[%s3 + $0x330] sm:$0xf]
    %v1149 = vld [vmem:[%s3 + $0x334] sm:$0xf]
    %v1150 = vld [vmem:[%s3 + $0x338] sm:$0xf]
    %v1151 = vld [vmem:[%s3 + $0x33c] sm:$0xf]
    %v1152 = vld [vmem:[%s3 + $0x340] sm:$0xf]
    %v1153 = vld [vmem:[%s3 + $0x344] sm:$0xf]
    %v1154 = vld [vmem:[%s3 + $0x348] sm:$0xf]
    %v1155 = vld [vmem:[%s3 + $0x34c] sm:$0xf]
    %v1156 = vld [vmem:[%s3 + $0x350] sm:$0xf]
    %v1157 = vld [vmem:[%s3 + $0x354] sm:$0xf]
    %v1158 = vld [vmem:[%s3 + $0x358] sm:$0xf]
    %v1159 = vld [vmem:[%s3 + $0x35c] sm:$0xf]
    %v1160 = vld [vmem:[%s3 + $0x360] sm:$0xf]
    %v1161 = vld [vmem:[%s3 + $0x364] sm:$0xf]
    %v1162 = vld [vmem:[%s3 + $0x368] sm:$0xf]
    %v1163 = vld [vmem:[%s3 + $0x36c] sm:$0xf]
    %v1164 = vld [vmem:[%s3 + $0x370] sm:$0xf]
    %v1165 = vld [vmem:[%s3 + $0x374] sm:$0xf]
    %v1166 = vld [vmem:[%s3 + $0x378] sm:$0xf]
    %v1167 = vld [vmem:[%s3 + $0x37c] sm:$0xf]
    %v1168 = vld [vmem:[%s3 + $0x380] sm:$0xf]
    %v1169 = vld [vmem:[%s3 + $0x384] sm:$0xf]
    %v1170 = vld [vmem:[%s3 + $0x388] sm:$0xf]
    %v1171 = vld [vmem:[%s3 + $0x38c] sm:$0xf]
    %v1172 = vld [vmem:[%s3 + $0x390] sm:$0xf]
    %v1173 = vld [vmem:[%s3 + $0x394] sm:$0xf]
    %v1174 = vld [vmem:[%s3 + $0x398] sm:$0xf]
    %v1175 = vld [vmem:[%s3 + $0x39c] sm:$0xf]
    %v1176 = vld [vmem:[%s3 + $0x3a0] sm:$0xf]
    %v1177 = vld [vmem:[%s3 + $0x3a4] sm:$0xf]
    %v1178 = vld [vmem:[%s3 + $0x3a8] sm:$0xf]
    %v1179 = vld [vmem:[%s3 + $0x3ac] sm:$0xf]
    %v1180 = vld [vmem:[%s3 + $0x3b0] sm:$0xf]
    %v1181 = vld [vmem:[%s3 + $0x3b4] sm:$0xf]
    %v1182 = vld [vmem:[%s3 + $0x3b8] sm:$0xf]
    %v1183 = vld [vmem:[%s3 + $0x3bc] sm:$0xf]
    %v1184 = vld [vmem:[%s3 + $0x3c0] sm:$0xf]
    %v1185 = vld [vmem:[%s3 + $0x3c4] sm:$0xf]
    %v1186 = vld [vmem:[%s3 + $0x3c8] sm:$0xf]
    %v1187 = vld [vmem:[%s3 + $0x3cc] sm:$0xf]
    %v1188 = vld [vmem:[%s3 + $0x3d0] sm:$0xf]
    %v1189 = vld [vmem:[%s3 + $0x3d4] sm:$0xf]
    %v1190 = vld [vmem:[%s3 + $0x3d8] sm:$0xf]
    %v1191 = vld [vmem:[%s3 + $0x3dc] sm:$0xf]
    %v1192 = vld [vmem:[%s3 + $0x3e0] sm:$0xf]
    %v1193 = vld [vmem:[%s3 + $0x3e4] sm:$0xf]
    %v1194 = vld [vmem:[%s3 + $0x3e8] sm:$0xf]
    %v1195 = vld [vmem:[%s3 + $0x3ec] sm:$0xf]
    %v1196 = vld [vmem:[%s3 + $0x3f0] sm:$0xf]
    %v1197 = vld [vmem:[%s3 + $0x3f4] sm:$0xf]
    %v1198 = vld [vmem:[%s3 + $0x3f8] sm:$0xf]
    %v1199 = vld [vmem:[%s3 + $0x3fc] sm:$0xf]
    %v1200 = vld [vmem:[%s3 + $0x400] sm:$0xf]
    %v1201 = vld [vmem:[%s3 + $0x404] sm:$0xf]
    %v1202 = vld [vmem:[%s3 + $0x408] sm:$0xf]
    %v1203 = vld [vmem:[%s3 + $0x40c] sm:$0xf]
    %v1204 = vld [vmem:[%s3 + $0x410] sm:$0xf]
    %v1205 = vld [vmem:[%s3 + $0x414] sm:$0xf]
    %v1206 = vld [vmem:[%s3 + $0x418] sm:$0xf]
    %v1207 = vld [vmem:[%s3 + $0x41c] sm:$0xf]
    %v1208 = vld [vmem:[%s3 + $0x420] sm:$0xf]
    %v1209 = vld [vmem:[%s3 + $0x424] sm:$0xf]
    %v1210 = vld [vmem:[%s3 + $0x428] sm:$0xf]
    %v1211 = vld [vmem:[%s3 + $0x42c] sm:$0xf]
    %v1212 = vld [vmem:[%s3 + $0x430] sm:$0xf]
    %v1213 = vld [vmem:[%s3 + $0x434] sm:$0xf]
    %v1214 = vld [vmem:[%s3 + $0x438] sm:$0xf]
    %v1215 = vld [vmem:[%s3 + $0x43c] sm:$0xf]
    %v1216 = vld [vmem:[%s3 + $0x440] sm:$0xf]
    %v1217 = vld [vmem:[%s3 + $0x444] sm:$0xf]
    %v1218 = vld [vmem:[%s3 + $0x448] sm:$0xf]
    %v1219 = vld [vmem:[%s3 + $0x44c] sm:$0xf]
    %v1220 = vld [vmem:[%s3 + $0x450] sm:$0xf]
    %v1221 = vld [vmem:[%s3 + $0x454] sm:$0xf]
    %v1222 = vld [vmem:[%s3 + $0x458] sm:$0xf]
    %v1223 = vld [vmem:[%s3 + $0x45c] sm:$0xf]
    %v1224 = vld [vmem:[%s3 + $0x460] sm:$0xf]
    %v1225 = vld [vmem:[%s3 + $0x464] sm:$0xf]
    %v1226 = vld [vmem:[%s3 + $0x468] sm:$0xf]
    %v1227 = vld [vmem:[%s3 + $0x46c] sm:$0xf]
    %v1228 = vld [vmem:[%s3 + $0x470] sm:$0xf]
    %v1229 = vld [vmem:[%s3 + $0x474] sm:$0xf]
    %v1230 = vld [vmem:[%s3 + $0x478] sm:$0xf]
    %v1231 = vld [vmem:[%s3 + $0x47c] sm:$0xf]
    %v1232 = vld [vmem:[%s4] sm:$0x1]
    %v1234 = vperm.slane %v1232, 0
    %v1524 = vunpack.c.l.b16 %v944
    %v1525 = vunpack.c.l.b16 %v945
    %v1526 = vunpack.c.l.b16 %v946
    %v1527 = vunpack.c.l.b16 %v947
    %v1528 = vunpack.c.l.b16 %v948
    %v1529 = vunpack.c.l.b16 %v949
    %v1530 = vunpack.c.l.b16 %v950
    %v1531 = vunpack.c.l.b16 %v951
    %v1532 = vunpack.c.l.b16 %v952
    %v1533 = vunpack.c.l.b16 %v953
    %v1534 = vunpack.c.l.b16 %v954
    %v1535 = vunpack.c.l.b16 %v955
    %v1536 = vunpack.c.l.b16 %v956
    %v1537 = vunpack.c.l.b16 %v957
    %v1538 = vunpack.c.l.b16 %v958
    %v1539 = vunpack.c.l.b16 %v959
    %v1540 = vunpack.c.l.b16 %v960
    %v1541 = vunpack.c.l.b16 %v961
    %v1542 = vunpack.c.l.b16 %v962
    %v1543 = vunpack.c.l.b16 %v963
    %v1544 = vunpack.c.l.b16 %v964
    %v1545 = vunpack.c.l.b16 %v965
    %v1546 = vunpack.c.l.b16 %v966
    %v1547 = vunpack.c.l.b16 %v967
    %v1548 = vunpack.c.l.b16 %v968
    %v1549 = vunpack.c.l.b16 %v969
    %v1550 = vunpack.c.l.b16 %v970
    %v1551 = vunpack.c.l.b16 %v971
    %v1552 = vunpack.c.l.b16 %v972
    %v1553 = vunpack.c.l.b16 %v973
    %v1554 = vunpack.c.l.b16 %v974
    %v1555 = vunpack.c.l.b16 %v975
    %v1556 = vunpack.c.l.b16 %v976
    %v1557 = vunpack.c.l.b16 %v977
    %v1558 = vunpack.c.l.b16 %v978
    %v1559 = vunpack.c.l.b16 %v979
    %v1560 = vunpack.c.l.b16 %v980
    %v1561 = vunpack.c.l.b16 %v981
    %v1562 = vunpack.c.l.b16 %v982
    %v1563 = vunpack.c.l.b16 %v983
    %v1564 = vunpack.c.l.b16 %v984
    %v1565 = vunpack.c.l.b16 %v985
    %v1566 = vunpack.c.l.b16 %v986
    %v1567 = vunpack.c.l.b16 %v987
    %v1568 = vunpack.c.l.b16 %v988
    %v1569 = vunpack.c.l.b16 %v989
    %v1570 = vunpack.c.l.b16 %v990
    %v1571 = vunpack.c.l.b16 %v991
    %v1572 = vunpack.c.l.b16 %v992
    %v1573 = vunpack.c.l.b16 %v993
    %v1574 = vunpack.c.l.b16 %v994
    %v1575 = vunpack.c.l.b16 %v995
    %v1576 = vunpack.c.l.b16 %v996
    %v1577 = vunpack.c.l.b16 %v997
    %v1578 = vunpack.c.l.b16 %v998
    %v1579 = vunpack.c.l.b16 %v999
    %v1580 = vunpack.c.l.b16 %v1000
    %v1581 = vunpack.c.l.b16 %v1001
    %v1582 = vunpack.c.l.b16 %v1002
    %v1583 = vunpack.c.l.b16 %v1003
    %v1584 = vunpack.c.l.b16 %v1004
    %v1585 = vunpack.c.l.b16 %v1005
    %v1586 = vunpack.c.l.b16 %v1006
    %v1587 = vunpack.c.l.b16 %v1007
    %v1588 = vunpack.c.l.b16 %v1008
    %v1589 = vunpack.c.l.b16 %v1009
    %v1590 = vunpack.c.l.b16 %v1010
    %v1591 = vunpack.c.l.b16 %v1011
    %v1592 = vunpack.c.l.b16 %v1012
    %v1593 = vunpack.c.l.b16 %v1013
    %v1594 = vunpack.c.l.b16 %v1014
    %v1595 = vunpack.c.l.b16 %v1015
    %v1596 = vunpack.c.l.b16 %v1016
    %v1597 = vunpack.c.l.b16 %v1017
    %v1598 = vunpack.c.l.b16 %v1018
    %v1599 = vunpack.c.l.b16 %v1019
    %v1600 = vunpack.c.l.b16 %v1020
    %v1601 = vunpack.c.l.b16 %v1021
    %v1602 = vunpack.c.l.b16 %v1022
    %v1603 = vunpack.c.l.b16 %v1023
    %v1604 = vunpack.c.l.b16 %v1024
    %v1605 = vunpack.c.l.b16 %v1025
    %v1606 = vunpack.c.l.b16 %v1026
    %v1607 = vunpack.c.l.b16 %v1027
    %v1608 = vunpack.c.l.b16 %v1028
    %v1609 = vunpack.c.l.b16 %v1029
    %v1610 = vunpack.c.l.b16 %v1030
    %v1611 = vunpack.c.l.b16 %v1031
    %v1612 = vunpack.c.l.b16 %v1032
    %v1613 = vunpack.c.l.b16 %v1033
    %v1614 = vunpack.c.l.b16 %v1034
    %v1615 = vunpack.c.l.b16 %v1035
    %v1616 = vunpack.c.l.b16 %v1036
    %v1617 = vunpack.c.l.b16 %v1037
    %v1618 = vunpack.c.l.b16 %v1038
    %v1619 = vunpack.c.l.b16 %v1039
    %v1620 = vunpack.c.l.b16 %v1040
    %v1621 = vunpack.c.l.b16 %v1041
    %v1622 = vunpack.c.l.b16 %v1042
    %v1623 = vunpack.c.l.b16 %v1043
    %v1624 = vunpack.c.l.b16 %v1044
    %v1625 = vunpack.c.l.b16 %v1045
    %v1626 = vunpack.c.l.b16 %v1046
    %v1627 = vunpack.c.l.b16 %v1047
    %v1628 = vunpack.c.l.b16 %v1048
    %v1629 = vunpack.c.l.b16 %v1049
    %v1630 = vunpack.c.l.b16 %v1050
    %v1631 = vunpack.c.l.b16 %v1051
    %v1632 = vunpack.c.l.b16 %v1052
    %v1633 = vunpack.c.l.b16 %v1053
    %v1634 = vunpack.c.l.b16 %v1054
    %v1635 = vunpack.c.l.b16 %v1055
    %v1636 = vunpack.c.l.b16 %v1056
    %v1637 = vunpack.c.l.b16 %v1057
    %v1638 = vunpack.c.l.b16 %v1058
    %v1639 = vunpack.c.l.b16 %v1059
    %v1640 = vunpack.c.l.b16 %v1060
    %v1641 = vunpack.c.l.b16 %v1061
    %v1642 = vunpack.c.l.b16 %v1062
    %v1643 = vunpack.c.l.b16 %v1063
    %v1644 = vunpack.c.l.b16 %v1064
    %v1645 = vunpack.c.l.b16 %v1065
    %v1646 = vunpack.c.l.b16 %v1066
    %v1647 = vunpack.c.l.b16 %v1067
    %v1648 = vunpack.c.l.b16 %v1068
    %v1649 = vunpack.c.l.b16 %v1069
    %v1650 = vunpack.c.l.b16 %v1070
    %v1651 = vunpack.c.l.b16 %v1071
    %v1652 = vunpack.c.l.b16 %v1072
    %v1653 = vunpack.c.l.b16 %v1073
    %v1654 = vunpack.c.l.b16 %v1074
    %v1655 = vunpack.c.l.b16 %v1075
    %v1656 = vunpack.c.l.b16 %v1076
    %v1657 = vunpack.c.l.b16 %v1077
    %v1658 = vunpack.c.l.b16 %v1078
    %v1659 = vunpack.c.l.b16 %v1079
    %v1660 = vunpack.c.l.b16 %v1080
    %v1661 = vunpack.c.l.b16 %v1081
    %v1662 = vunpack.c.l.b16 %v1082
    %v1663 = vunpack.c.l.b16 %v1083
    %v1664 = vunpack.c.l.b16 %v1084
    %v1665 = vunpack.c.l.b16 %v1085
    %v1666 = vunpack.c.l.b16 %v1086
    %v1667 = vunpack.c.l.b16 %v1087
    %v1668 = vunpack.c.l.b16 %v1088
    %v1669 = vunpack.c.l.b16 %v1089
    %v1670 = vunpack.c.l.b16 %v1090
    %v1671 = vunpack.c.l.b16 %v1091
    %v1672 = vunpack.c.l.b16 %v1092
    %v1673 = vunpack.c.l.b16 %v1093
    %v1674 = vunpack.c.l.b16 %v1094
    %v1675 = vunpack.c.l.b16 %v1095
    %v1676 = vunpack.c.l.b16 %v1096
    %v1677 = vunpack.c.l.b16 %v1097
    %v1678 = vunpack.c.l.b16 %v1098
    %v1679 = vunpack.c.l.b16 %v1099
    %v1680 = vunpack.c.l.b16 %v1100
    %v1681 = vunpack.c.l.b16 %v1101
    %v1682 = vunpack.c.l.b16 %v1102
    %v1683 = vunpack.c.l.b16 %v1103
    %v1684 = vunpack.c.l.b16 %v1104
    %v1685 = vunpack.c.l.b16 %v1105
    %v1686 = vunpack.c.l.b16 %v1106
    %v1687 = vunpack.c.l.b16 %v1107
    %v1688 = vunpack.c.l.b16 %v1108
    %v1689 = vunpack.c.l.b16 %v1109
    %v1690 = vunpack.c.l.b16 %v1110
    %v1691 = vunpack.c.l.b16 %v1111
    %v1692 = vunpack.c.l.b16 %v1112
    %v1693 = vunpack.c.l.b16 %v1113
    %v1694 = vunpack.c.l.b16 %v1114
    %v1695 = vunpack.c.l.b16 %v1115
    %v1696 = vunpack.c.l.b16 %v1116
    %v1697 = vunpack.c.l.b16 %v1117
    %v1698 = vunpack.c.l.b16 %v1118
    %v1699 = vunpack.c.l.b16 %v1119
    %v1700 = vunpack.c.l.b16 %v1120
    %v1701 = vunpack.c.l.b16 %v1121
    %v1702 = vunpack.c.l.b16 %v1122
    %v1703 = vunpack.c.l.b16 %v1123
    %v1704 = vunpack.c.l.b16 %v1124
    %v1705 = vunpack.c.l.b16 %v1125
    %v1706 = vunpack.c.l.b16 %v1126
    %v1707 = vunpack.c.l.b16 %v1127
    %v1708 = vunpack.c.l.b16 %v1128
    %v1709 = vunpack.c.l.b16 %v1129
    %v1710 = vunpack.c.l.b16 %v1130
    %v1711 = vunpack.c.l.b16 %v1131
    %v1712 = vunpack.c.l.b16 %v1132
    %v1713 = vunpack.c.l.b16 %v1133
    %v1714 = vunpack.c.l.b16 %v1134
    %v1715 = vunpack.c.l.b16 %v1135
    %v1716 = vunpack.c.l.b16 %v1136
    %v1717 = vunpack.c.l.b16 %v1137
    %v1718 = vunpack.c.l.b16 %v1138
    %v1719 = vunpack.c.l.b16 %v1139
    %v1720 = vunpack.c.l.b16 %v1140
    %v1721 = vunpack.c.l.b16 %v1141
    %v1722 = vunpack.c.l.b16 %v1142
    %v1723 = vunpack.c.l.b16 %v1143
    %v1724 = vunpack.c.l.b16 %v1144
    %v1725 = vunpack.c.l.b16 %v1145
    %v1726 = vunpack.c.l.b16 %v1146
    %v1727 = vunpack.c.l.b16 %v1147
    %v1728 = vunpack.c.l.b16 %v1148
    %v1729 = vunpack.c.l.b16 %v1149
    %v1730 = vunpack.c.l.b16 %v1150
    %v1731 = vunpack.c.l.b16 %v1151
    %v1732 = vunpack.c.l.b16 %v1152
    %v1733 = vunpack.c.l.b16 %v1153
    %v1734 = vunpack.c.l.b16 %v1154
    %v1735 = vunpack.c.l.b16 %v1155
    %v1736 = vunpack.c.l.b16 %v1156
    %v1737 = vunpack.c.l.b16 %v1157
    %v1738 = vunpack.c.l.b16 %v1158
    %v1739 = vunpack.c.l.b16 %v1159
    %v1740 = vunpack.c.l.b16 %v1160
    %v1741 = vunpack.c.l.b16 %v1161
    %v1742 = vunpack.c.l.b16 %v1162
    %v1743 = vunpack.c.l.b16 %v1163
    %v1744 = vunpack.c.l.b16 %v1164
    %v1745 = vunpack.c.l.b16 %v1165
    %v1746 = vunpack.c.l.b16 %v1166
    %v1747 = vunpack.c.l.b16 %v1167
    %v1748 = vunpack.c.l.b16 %v1168
    %v1749 = vunpack.c.l.b16 %v1169
    %v1750 = vunpack.c.l.b16 %v1170
    %v1751 = vunpack.c.l.b16 %v1171
    %v1752 = vunpack.c.l.b16 %v1172
    %v1753 = vunpack.c.l.b16 %v1173
    %v1754 = vunpack.c.l.b16 %v1174
    %v1755 = vunpack.c.l.b16 %v1175
    %v1756 = vunpack.c.l.b16 %v1176
    %v1757 = vunpack.c.l.b16 %v1177
    %v1758 = vunpack.c.l.b16 %v1178
    %v1759 = vunpack.c.l.b16 %v1179
    %v1760 = vunpack.c.l.b16 %v1180
    %v1761 = vunpack.c.l.b16 %v1181
    %v1762 = vunpack.c.l.b16 %v1182
    %v1763 = vunpack.c.l.b16 %v1183
    %v1764 = vunpack.c.l.b16 %v1184
    %v1765 = vunpack.c.l.b16 %v1185
    %v1766 = vunpack.c.l.b16 %v1186
    %v1767 = vunpack.c.l.b16 %v1187
    %v1768 = vunpack.c.l.b16 %v1188
    %v1769 = vunpack.c.l.b16 %v1189
    %v1770 = vunpack.c.l.b16 %v1190
    %v1771 = vunpack.c.l.b16 %v1191
    %v1772 = vunpack.c.l.b16 %v1192
    %v1773 = vunpack.c.l.b16 %v1193
    %v1774 = vunpack.c.l.b16 %v1194
    %v1775 = vunpack.c.l.b16 %v1195
    %v1776 = vunpack.c.l.b16 %v1196
    %v1777 = vunpack.c.l.b16 %v1197
    %v1778 = vunpack.c.l.b16 %v1198
    %v1779 = vunpack.c.l.b16 %v1199
    %v1780 = vunpack.c.l.b16 %v1200
    %v1781 = vunpack.c.l.b16 %v1201
    %v1782 = vunpack.c.l.b16 %v1202
    %v1783 = vunpack.c.l.b16 %v1203
    %v1784 = vunpack.c.l.b16 %v1204
    %v1785 = vunpack.c.l.b16 %v1205
    %v1786 = vunpack.c.l.b16 %v1206
    %v1787 = vunpack.c.l.b16 %v1207
    %v1788 = vunpack.c.l.b16 %v1208
    %v1789 = vunpack.c.l.b16 %v1209
    %v1790 = vunpack.c.l.b16 %v1210
    %v1791 = vunpack.c.l.b16 %v1211
    %v1792 = vunpack.c.l.b16 %v1212
    %v1793 = vunpack.c.l.b16 %v1213
    %v1794 = vunpack.c.l.b16 %v1214
    %v1795 = vunpack.c.l.b16 %v1215
    %v1796 = vunpack.c.l.b16 %v1216
    %v1797 = vunpack.c.l.b16 %v1217
    %v1798 = vunpack.c.l.b16 %v1218
    %v1799 = vunpack.c.l.b16 %v1219
    %v1800 = vunpack.c.l.b16 %v1220
    %v1801 = vunpack.c.l.b16 %v1221
    %v1802 = vunpack.c.l.b16 %v1222
    %v1803 = vunpack.c.l.b16 %v1223
    %v1804 = vunpack.c.l.b16 %v1224
    %v1805 = vunpack.c.l.b16 %v1225
    %v1806 = vunpack.c.l.b16 %v1226
    %v1807 = vunpack.c.l.b16 %v1227
    %v1808 = vunpack.c.l.b16 %v1228
    %v1809 = vunpack.c.l.b16 %v1229
    %v1810 = vunpack.c.l.b16 %v1230
    %v1811 = vunpack.c.l.b16 %v1231
    %v1812 = vpack.c.b16 %v1525, %v1524
    %v1813 = vpack.c.b16 %v1527, %v1526
    %v1814 = vpack.c.b16 %v1529, %v1528
    %v1815 = vpack.c.b16 %v1531, %v1530
    %v1816 = vpack.c.b16 %v1533, %v1532
    %v1817 = vpack.c.b16 %v1535, %v1534
    %v1818 = vpack.c.b16 %v1537, %v1536
    %v1819 = vpack.c.b16 %v1539, %v1538
    %v1820 = vpack.c.b16 %v1541, %v1540
    %v1821 = vpack.c.b16 %v1543, %v1542
    %v1822 = vpack.c.b16 %v1545, %v1544
    %v1823 = vpack.c.b16 %v1547, %v1546
    %v1824 = vpack.c.b16 %v1549, %v1548
    %v1825 = vpack.c.b16 %v1551, %v1550
    %v1826 = vpack.c.b16 %v1553, %v1552
    %v1827 = vpack.c.b16 %v1555, %v1554
    %v1828 = vpack.c.b16 %v1557, %v1556
    %v1829 = vpack.c.b16 %v1559, %v1558
    %v1830 = vpack.c.b16 %v1561, %v1560
    %v1831 = vpack.c.b16 %v1563, %v1562
    %v1832 = vpack.c.b16 %v1565, %v1564
    %v1833 = vpack.c.b16 %v1567, %v1566
    %v1834 = vpack.c.b16 %v1569, %v1568
    %v1835 = vpack.c.b16 %v1571, %v1570
    %v1836 = vpack.c.b16 %v1573, %v1572
    %v1837 = vpack.c.b16 %v1575, %v1574
    %v1838 = vpack.c.b16 %v1577, %v1576
    %v1839 = vpack.c.b16 %v1579, %v1578
    %v1840 = vpack.c.b16 %v1581, %v1580
    %v1841 = vpack.c.b16 %v1583, %v1582
    %v1842 = vpack.c.b16 %v1585, %v1584
    %v1843 = vpack.c.b16 %v1587, %v1586
    %v1844 = vpack.c.b16 %v1589, %v1588
    %v1845 = vpack.c.b16 %v1591, %v1590
    %v1846 = vpack.c.b16 %v1593, %v1592
    %v1847 = vpack.c.b16 %v1595, %v1594
    %v1848 = vpack.c.b16 %v1597, %v1596
    %v1849 = vpack.c.b16 %v1599, %v1598
    %v1850 = vpack.c.b16 %v1601, %v1600
    %v1851 = vpack.c.b16 %v1603, %v1602
    %v1852 = vpack.c.b16 %v1605, %v1604
    %v1853 = vpack.c.b16 %v1607, %v1606
    %v1854 = vpack.c.b16 %v1609, %v1608
    %v1855 = vpack.c.b16 %v1611, %v1610
    %v1856 = vpack.c.b16 %v1613, %v1612
    %v1857 = vpack.c.b16 %v1615, %v1614
    %v1858 = vpack.c.b16 %v1617, %v1616
    %v1859 = vpack.c.b16 %v1619, %v1618
    %v1860 = vpack.c.b16 %v1621, %v1620
    %v1861 = vpack.c.b16 %v1623, %v1622
    %v1862 = vpack.c.b16 %v1625, %v1624
    %v1863 = vpack.c.b16 %v1627, %v1626
    %v1864 = vpack.c.b16 %v1629, %v1628
    %v1865 = vpack.c.b16 %v1631, %v1630
    %v1866 = vpack.c.b16 %v1633, %v1632
    %v1867 = vpack.c.b16 %v1635, %v1634
    %v1868 = vpack.c.b16 %v1637, %v1636
    %v1869 = vpack.c.b16 %v1639, %v1638
    %v1870 = vpack.c.b16 %v1641, %v1640
    %v1871 = vpack.c.b16 %v1643, %v1642
    %v1872 = vpack.c.b16 %v1645, %v1644
    %v1873 = vpack.c.b16 %v1647, %v1646
    %v1874 = vpack.c.b16 %v1649, %v1648
    %v1875 = vpack.c.b16 %v1651, %v1650
    %v1876 = vpack.c.b16 %v1653, %v1652
    %v1877 = vpack.c.b16 %v1655, %v1654
    %v1878 = vpack.c.b16 %v1657, %v1656
    %v1879 = vpack.c.b16 %v1659, %v1658
    %v1880 = vpack.c.b16 %v1661, %v1660
    %v1881 = vpack.c.b16 %v1663, %v1662
    %v1882 = vpack.c.b16 %v1665, %v1664
    %v1883 = vpack.c.b16 %v1667, %v1666
    %v1884 = vpack.c.b16 %v1669, %v1668
    %v1885 = vpack.c.b16 %v1671, %v1670
    %v1886 = vpack.c.b16 %v1673, %v1672
    %v1887 = vpack.c.b16 %v1675, %v1674
    %v1888 = vpack.c.b16 %v1677, %v1676
    %v1889 = vpack.c.b16 %v1679, %v1678
    %v1890 = vpack.c.b16 %v1681, %v1680
    %v1891 = vpack.c.b16 %v1683, %v1682
    %v1892 = vpack.c.b16 %v1685, %v1684
    %v1893 = vpack.c.b16 %v1687, %v1686
    %v1894 = vpack.c.b16 %v1689, %v1688
    %v1895 = vpack.c.b16 %v1691, %v1690
    %v1896 = vpack.c.b16 %v1693, %v1692
    %v1897 = vpack.c.b16 %v1695, %v1694
    %v1898 = vpack.c.b16 %v1697, %v1696
    %v1899 = vpack.c.b16 %v1699, %v1698
    %v1900 = vpack.c.b16 %v1701, %v1700
    %v1901 = vpack.c.b16 %v1703, %v1702
    %v1902 = vpack.c.b16 %v1705, %v1704
    %v1903 = vpack.c.b16 %v1707, %v1706
    %v1904 = vpack.c.b16 %v1709, %v1708
    %v1905 = vpack.c.b16 %v1711, %v1710
    %v1906 = vpack.c.b16 %v1713, %v1712
    %v1907 = vpack.c.b16 %v1715, %v1714
    %v1908 = vpack.c.b16 %v1717, %v1716
    %v1909 = vpack.c.b16 %v1719, %v1718
    %v1910 = vpack.c.b16 %v1721, %v1720
    %v1911 = vpack.c.b16 %v1723, %v1722
    %v1912 = vpack.c.b16 %v1725, %v1724
    %v1913 = vpack.c.b16 %v1727, %v1726
    %v1914 = vpack.c.b16 %v1729, %v1728
    %v1915 = vpack.c.b16 %v1731, %v1730
    %v1916 = vpack.c.b16 %v1733, %v1732
    %v1917 = vpack.c.b16 %v1735, %v1734
    %v1918 = vpack.c.b16 %v1737, %v1736
    %v1919 = vpack.c.b16 %v1739, %v1738
    %v1920 = vpack.c.b16 %v1741, %v1740
    %v1921 = vpack.c.b16 %v1743, %v1742
    %v1922 = vpack.c.b16 %v1745, %v1744
    %v1923 = vpack.c.b16 %v1747, %v1746
    %v1924 = vpack.c.b16 %v1749, %v1748
    %v1925 = vpack.c.b16 %v1751, %v1750
    %v1926 = vpack.c.b16 %v1753, %v1752
    %v1927 = vpack.c.b16 %v1755, %v1754
    %v1928 = vpack.c.b16 %v1757, %v1756
    %v1929 = vpack.c.b16 %v1759, %v1758
    %v1930 = vpack.c.b16 %v1761, %v1760
    %v1931 = vpack.c.b16 %v1763, %v1762
    %v1932 = vpack.c.b16 %v1765, %v1764
    %v1933 = vpack.c.b16 %v1767, %v1766
    %v1934 = vpack.c.b16 %v1769, %v1768
    %v1935 = vpack.c.b16 %v1771, %v1770
    %v1936 = vpack.c.b16 %v1773, %v1772
    %v1937 = vpack.c.b16 %v1775, %v1774
    %v1938 = vpack.c.b16 %v1777, %v1776
    %v1939 = vpack.c.b16 %v1779, %v1778
    %v1940 = vpack.c.b16 %v1781, %v1780
    %v1941 = vpack.c.b16 %v1783, %v1782
    %v1942 = vpack.c.b16 %v1785, %v1784
    %v1943 = vpack.c.b16 %v1787, %v1786
    %v1944 = vpack.c.b16 %v1789, %v1788
    %v1945 = vpack.c.b16 %v1791, %v1790
    %v1946 = vpack.c.b16 %v1793, %v1792
    %v1947 = vpack.c.b16 %v1795, %v1794
    %v1948 = vpack.c.b16 %v1797, %v1796
    %v1949 = vpack.c.b16 %v1799, %v1798
    %v1950 = vpack.c.b16 %v1801, %v1800
    %v1951 = vpack.c.b16 %v1803, %v1802
    %v1952 = vpack.c.b16 %v1805, %v1804
    %v1953 = vpack.c.b16 %v1807, %v1806
    %v1954 = vpack.c.b16 %v1809, %v1808
    %v1955 = vpack.c.b16 %v1811, %v1810
    %2100 = vmatpush.bf16.msra.mxu0 %v1819
    %2101 = vmatpush.bf16.msra.mxu0 %v1818
    %2102 = vmatpush.bf16.msra.mxu0 %v1817
    %2103 = vmatpush.bf16.msra.mxu0 %v1816
    %2104 = vmatpush.bf16.msra.mxu0 %v1815
    %2105 = vmatpush.bf16.msra.mxu0 %v1814
    %2106 = vmatpush.bf16.msra.mxu0 %v1813
    %2107 = vmatpush.bf16.msra.mxu0 %v1812
    %2108 = vmatmul.bf16.gmra.mxu0 %v926
    %v2109 = vpop.f32.mrf.mxu0
    %v2110 = vadd.f32 %v1234, %v2109
    %v2111 = vpop.f32.mrf.mxu0
    %2112 = vdwg.mxu0
    %2113 = vmatpush.bf16.msra.mxu0 %v1827
    %2114 = vmatpush.bf16.msra.mxu0 %v1826
    %2115 = vmatpush.bf16.msra.mxu0 %v1825
    %2116 = vmatpush.bf16.msra.mxu0 %v1824
    %2117 = vmatpush.bf16.msra.mxu0 %v1823
    %2118 = vmatpush.bf16.msra.mxu0 %v1822
    %2119 = vmatpush.bf16.msra.mxu0 %v1821
    %2120 = vmatpush.bf16.msra.mxu0 %v1820
    %2121 = vmatmul.bf16.gmra.mxu0 %v927
    %v2122 = vpop.f32.mrf.mxu0
    %v2123 = vadd.f32 %v2110, %v2122
    %v2124 = vpop.f32.mrf.mxu0
    %2125 = vdwg.mxu0
    %2126 = vmatpush.bf16.msra.mxu0 %v1835
    %2127 = vmatpush.bf16.msra.mxu0 %v1834
    %2128 = vmatpush.bf16.msra.mxu0 %v1833
    %2129 = vmatpush.bf16.msra.mxu0 %v1832
    %2130 = vmatpush.bf16.msra.mxu0 %v1831
    %2131 = vmatpush.bf16.msra.mxu0 %v1830
    %2132 = vmatpush.bf16.msra.mxu0 %v1829
    %2133 = vmatpush.bf16.msra.mxu0 %v1828
    %2134 = vmatmul.bf16.gmra.mxu0 %v928
    %v2135 = vpop.f32.mrf.mxu0
    %v2136 = vadd.f32 %v2123, %v2135
    %v2137 = vpop.f32.mrf.mxu0
    %2138 = vdwg.mxu0
    %2139 = vmatpush.bf16.msra.mxu0 %v1843
    %2140 = vmatpush.bf16.msra.mxu0 %v1842
    %2141 = vmatpush.bf16.msra.mxu0 %v1841
    %2142 = vmatpush.bf16.msra.mxu0 %v1840
    %2143 = vmatpush.bf16.msra.mxu0 %v1839
    %2144 = vmatpush.bf16.msra.mxu0 %v1838
    %2145 = vmatpush.bf16.msra.mxu0 %v1837
    %2146 = vmatpush.bf16.msra.mxu0 %v1836
    %2147 = vmatmul.bf16.gmra.mxu0 %v929
    %v2148 = vpop.f32.mrf.mxu0
    %v2149 = vadd.f32 %v2136, %v2148
    %v2150 = vpop.f32.mrf.mxu0
    %2151 = vdwg.mxu0
    %2152 = vmatpush.bf16.msra.mxu0 %v1851
    %2153 = vmatpush.bf16.msra.mxu0 %v1850
    %2154 = vmatpush.bf16.msra.mxu0 %v1849
    %2155 = vmatpush.bf16.msra.mxu0 %v1848
    %2156 = vmatpush.bf16.msra.mxu0 %v1847
    %2157 = vmatpush.bf16.msra.mxu0 %v1846
    %2158 = vmatpush.bf16.msra.mxu0 %v1845
    %2159 = vmatpush.bf16.msra.mxu0 %v1844
    %2160 = vmatmul.bf16.gmra.mxu0 %v930
    %v2161 = vpop.f32.mrf.mxu0
    %v2162 = vadd.f32 %v2149, %v2161
    %v2163 = vpop.f32.mrf.mxu0
    %2164 = vdwg.mxu0
    %2165 = vmatpush.bf16.msra.mxu0 %v1859
    %2166 = vmatpush.bf16.msra.mxu0 %v1858
    %2167 = vmatpush.bf16.msra.mxu0 %v1857
    %2168 = vmatpush.bf16.msra.mxu0 %v1856
    %2169 = vmatpush.bf16.msra.mxu0 %v1855
    %2170 = vmatpush.bf16.msra.mxu0 %v1854
    %2171 = vmatpush.bf16.msra.mxu0 %v1853
    %2172 = vmatpush.bf16.msra.mxu0 %v1852
    %2173 = vmatmul.bf16.gmra.mxu0 %v931
    %v2174 = vpop.f32.mrf.mxu0
    %v2175 = vadd.f32 %v2162, %v2174
    %v2176 = vpop.f32.mrf.mxu0
    %2177 = vdwg.mxu0
    %2178 = vmatpush.bf16.msra.mxu0 %v1867
    %2179 = vmatpush.bf16.msra.mxu0 %v1866
    %2180 = vmatpush.bf16.msra.mxu0 %v1865
    %2181 = vmatpush.bf16.msra.mxu0 %v1864
    %2182 = vmatpush.bf16.msra.mxu0 %v1863
    %2183 = vmatpush.bf16.msra.mxu0 %v1862
    %2184 = vmatpush.bf16.msra.mxu0 %v1861
    %2185 = vmatpush.bf16.msra.mxu0 %v1860
    %2186 = vmatmul.bf16.gmra.mxu0 %v932
    %v2187 = vpop.f32.mrf.mxu0
    %v2188 = vadd.f32 %v2175, %v2187
    %v2189 = vpop.f32.mrf.mxu0
    %2190 = vdwg.mxu0
    %2191 = vmatpush.bf16.msra.mxu0 %v1875
    %2192 = vmatpush.bf16.msra.mxu0 %v1874
    %2193 = vmatpush.bf16.msra.mxu0 %v1873
    %2194 = vmatpush.bf16.msra.mxu0 %v1872
    %2195 = vmatpush.bf16.msra.mxu0 %v1871
    %2196 = vmatpush.bf16.msra.mxu0 %v1870
    %2197 = vmatpush.bf16.msra.mxu0 %v1869
    %2198 = vmatpush.bf16.msra.mxu0 %v1868
    %2199 = vmatmul.bf16.gmra.mxu0 %v933
    %v2200 = vpop.f32.mrf.mxu0
    %v2201 = vadd.f32 %v2188, %v2200
    %v2202 = vpop.f32.mrf.mxu0
    %2203 = vdwg.mxu0
    %2204 = vmatpush.bf16.msra.mxu0 %v1883
    %2205 = vmatpush.bf16.msra.mxu0 %v1882
    %2206 = vmatpush.bf16.msra.mxu0 %v1881
    %2207 = vmatpush.bf16.msra.mxu0 %v1880
    %2208 = vmatpush.bf16.msra.mxu0 %v1879
    %2209 = vmatpush.bf16.msra.mxu0 %v1878
    %2210 = vmatpush.bf16.msra.mxu0 %v1877
    %2211 = vmatpush.bf16.msra.mxu0 %v1876
    %2212 = vmatmul.bf16.gmra.mxu0 %v934
    %v2213 = vpop.f32.mrf.mxu0
    %v2214 = vadd.f32 %v2201, %v2213
    %v2215 = vpop.f32.mrf.mxu0
    %2216 = vdwg.mxu0
    %2217 = vmatpush.bf16.msra.mxu0 %v1891
    %2218 = vmatpush.bf16.msra.mxu0 %v1890
    %2219 = vmatpush.bf16.msra.mxu0 %v1889
    %2220 = vmatpush.bf16.msra.mxu0 %v1888
    %2221 = vmatpush.bf16.msra.mxu0 %v1887
    %2222 = vmatpush.bf16.msra.mxu0 %v1886
    %2223 = vmatpush.bf16.msra.mxu0 %v1885
    %2224 = vmatpush.bf16.msra.mxu0 %v1884
    %2225 = vmatmul.bf16.gmra.mxu0 %v935
    %v2226 = vpop.f32.mrf.mxu0
    %v2227 = vadd.f32 %v2214, %v2226
    %v2228 = vpop.f32.mrf.mxu0
    %2229 = vdwg.mxu0
    %2230 = vmatpush.bf16.msra.mxu0 %v1899
    %2231 = vmatpush.bf16.msra.mxu0 %v1898
    %2232 = vmatpush.bf16.msra.mxu0 %v1897
    %2233 = vmatpush.bf16.msra.mxu0 %v1896
    %2234 = vmatpush.bf16.msra.mxu0 %v1895
    %2235 = vmatpush.bf16.msra.mxu0 %v1894
    %2236 = vmatpush.bf16.msra.mxu0 %v1893
    %2237 = vmatpush.bf16.msra.mxu0 %v1892
    %2238 = vmatmul.bf16.gmra.mxu0 %v936
    %v2239 = vpop.f32.mrf.mxu0
    %v2240 = vadd.f32 %v2227, %v2239
    %v2241 = vpop.f32.mrf.mxu0
    %2242 = vdwg.mxu0
    %2243 = vmatpush.bf16.msra.mxu0 %v1907
    %2244 = vmatpush.bf16.msra.mxu0 %v1906
    %2245 = vmatpush.bf16.msra.mxu0 %v1905
    %2246 = vmatpush.bf16.msra.mxu0 %v1904
    %2247 = vmatpush.bf16.msra.mxu0 %v1903
    %2248 = vmatpush.bf16.msra.mxu0 %v1902
    %2249 = vmatpush.bf16.msra.mxu0 %v1901
    %2250 = vmatpush.bf16.msra.mxu0 %v1900
    %2251 = vmatmul.bf16.gmra.mxu0 %v937
    %v2252 = vpop.f32.mrf.mxu0
    %v2253 = vadd.f32 %v2240, %v2252
    %v2254 = vpop.f32.mrf.mxu0
    %2255 = vdwg.mxu0
    %2256 = vmatpush.bf16.msra.mxu0 %v1915
    %2257 = vmatpush.bf16.msra.mxu0 %v1914
    %2258 = vmatpush.bf16.msra.mxu0 %v1913
    %2259 = vmatpush.bf16.msra.mxu0 %v1912
    %2260 = vmatpush.bf16.msra.mxu0 %v1911
    %2261 = vmatpush.bf16.msra.mxu0 %v1910
    %2262 = vmatpush.bf16.msra.mxu0 %v1909
    %2263 = vmatpush.bf16.msra.mxu0 %v1908
    %2264 = vmatmul.bf16.gmra.mxu0 %v938
    %v2265 = vpop.f32.mrf.mxu0
    %v2266 = vadd.f32 %v2253, %v2265
    %v2267 = vpop.f32.mrf.mxu0
    %2268 = vdwg.mxu0
    %2269 = vmatpush.bf16.msra.mxu0 %v1923
    %2270 = vmatpush.bf16.msra.mxu0 %v1922
    %2271 = vmatpush.bf16.msra.mxu0 %v1921
    %2272 = vmatpush.bf16.msra.mxu0 %v1920
    %2273 = vmatpush.bf16.msra.mxu0 %v1919
    %2274 = vmatpush.bf16.msra.mxu0 %v1918
    %2275 = vmatpush.bf16.msra.mxu0 %v1917
    %2276 = vmatpush.bf16.msra.mxu0 %v1916
    %2277 = vmatmul.bf16.gmra.mxu0 %v939
    %v2278 = vpop.f32.mrf.mxu0
    %v2279 = vadd.f32 %v2266, %v2278
    %v2280 = vpop.f32.mrf.mxu0
    %2281 = vdwg.mxu0
    %2282 = vmatpush.bf16.msra.mxu0 %v1931
    %2283 = vmatpush.bf16.msra.mxu0 %v1930
    %2284 = vmatpush.bf16.msra.mxu0 %v1929
    %2285 = vmatpush.bf16.msra.mxu0 %v1928
    %2286 = vmatpush.bf16.msra.mxu0 %v1927
    %2287 = vmatpush.bf16.msra.mxu0 %v1926
    %2288 = vmatpush.bf16.msra.mxu0 %v1925
    %2289 = vmatpush.bf16.msra.mxu0 %v1924
    %2290 = vmatmul.bf16.gmra.mxu0 %v940
    %v2291 = vpop.f32.mrf.mxu0
    %v2292 = vadd.f32 %v2279, %v2291
    %v2293 = vpop.f32.mrf.mxu0
    %2294 = vdwg.mxu0
    %2295 = vmatpush.bf16.msra.mxu0 %v1939
    %2296 = vmatpush.bf16.msra.mxu0 %v1938
    %2297 = vmatpush.bf16.msra.mxu0 %v1937
    %2298 = vmatpush.bf16.msra.mxu0 %v1936
    %2299 = vmatpush.bf16.msra.mxu0 %v1935
    %2300 = vmatpush.bf16.msra.mxu0 %v1934
    %2301 = vmatpush.bf16.msra.mxu0 %v1933
    %2302 = vmatpush.bf16.msra.mxu0 %v1932
    %2303 = vmatmul.bf16.gmra.mxu0 %v941
    %v2304 = vpop.f32.mrf.mxu0
    %v2305 = vadd.f32 %v2292, %v2304
    %v2306 = vpop.f32.mrf.mxu0
    %2307 = vdwg.mxu0
    %2308 = vmatpush.bf16.msra.mxu0 %v1947
    %2309 = vmatpush.bf16.msra.mxu0 %v1946
    %2310 = vmatpush.bf16.msra.mxu0 %v1945
    %2311 = vmatpush.bf16.msra.mxu0 %v1944
    %2312 = vmatpush.bf16.msra.mxu0 %v1943
    %2313 = vmatpush.bf16.msra.mxu0 %v1942
    %2314 = vmatpush.bf16.msra.mxu0 %v1941
    %2315 = vmatpush.bf16.msra.mxu0 %v1940
    %2316 = vmatmul.bf16.gmra.mxu0 %v942
    %v2317 = vpop.f32.mrf.mxu0
    %v2318 = vadd.f32 %v2305, %v2317
    %v2319 = vpop.f32.mrf.mxu0
    %2320 = vdwg.mxu0
    %2321 = vmatpush.bf16.msra.mxu0 %v1955
    %2322 = vmatpush.bf16.msra.mxu0 %v1954
    %2323 = vmatpush.bf16.msra.mxu0 %v1953
    %2324 = vmatpush.bf16.msra.mxu0 %v1952
    %2325 = vmatpush.bf16.msra.mxu0 %v1951
    %2326 = vmatpush.bf16.msra.mxu0 %v1950
    %2327 = vmatpush.bf16.msra.mxu0 %v1949
    %2328 = vmatpush.bf16.msra.mxu0 %v1948
    %2329 = vmatmul.bf16.gmra.mxu0 %v943
    %v2330 = vpop.f32.mrf.mxu0
    %v2331 = vadd.f32 %v2318, %v2330
    %v2332 = vpop.f32.mrf.mxu0
    %2333 = vdwg.mxu0
    %v2334 = vmax.f32 %v2331, 0.0
    %v2335 = vpack.c.bf16 %v2334, %v2334
    %v2336 = vld [vmem:[%s5] sm:$0xf]
    %v2337 = vld [vmem:[%s5 + $0x4] sm:$0xf]
    %v2338 = vld [vmem:[%s5 + $0x8] sm:$0xf]
    %v2339 = vld [vmem:[%s5 + $0xc] sm:$0xf]
    %v2340 = vld [vmem:[%s5 + $0x10] sm:$0xf]
    %v2341 = vld [vmem:[%s5 + $0x14] sm:$0xf]
    %v2342 = vld [vmem:[%s5 + $0x18] sm:$0xf]
    %v2343 = vld [vmem:[%s5 + $0x1c] sm:$0xf]
    %v2344 = vld [vmem:[%s5 + $0x20] sm:$0xf]
    %v2345 = vld [vmem:[%s5 + $0x24] sm:$0xf]
    %v2346 = vld [vmem:[%s5 + $0x28] sm:$0xf]
    %v2347 = vld [vmem:[%s5 + $0x2c] sm:$0xf]
    %v2348 = vld [vmem:[%s5 + $0x30] sm:$0xf]
    %v2349 = vld [vmem:[%s5 + $0x34] sm:$0xf]
    %v2350 = vld [vmem:[%s5 + $0x38] sm:$0xf]
    %v2351 = vld [vmem:[%s5 + $0x3c] sm:$0xf]
    %v2352 = vld [vmem:[%s6] sm:$0x1]
    %v2354 = vperm.slane %v2352, 0
    %v2372 = vunpack.c.l.b16 %v2336
    %v2373 = vunpack.c.l.b16 %v2337
    %v2374 = vunpack.c.l.b16 %v2338
    %v2375 = vunpack.c.l.b16 %v2339
    %v2376 = vunpack.c.l.b16 %v2340
    %v2377 = vunpack.c.l.b16 %v2341
    %v2378 = vunpack.c.l.b16 %v2342
    %v2379 = vunpack.c.l.b16 %v2343
    %v2380 = vunpack.c.l.b16 %v2344
    %v2381 = vunpack.c.l.b16 %v2345
    %v2382 = vunpack.c.l.b16 %v2346
    %v2383 = vunpack.c.l.b16 %v2347
    %v2384 = vunpack.c.l.b16 %v2348
    %v2385 = vunpack.c.l.b16 %v2349
    %v2386 = vunpack.c.l.b16 %v2350
    %v2387 = vunpack.c.l.b16 %v2351
    %v2388 = vpack.c.b16 %v2373, %v2372
    %v2389 = vpack.c.b16 %v2375, %v2374
    %v2390 = vpack.c.b16 %v2377, %v2376
    %v2391 = vpack.c.b16 %v2379, %v2378
    %v2392 = vpack.c.b16 %v2381, %v2380
    %v2393 = vpack.c.b16 %v2383, %v2382
    %v2394 = vpack.c.b16 %v2385, %v2384
    %v2395 = vpack.c.b16 %v2387, %v2386
    %2404 = vmatpush.bf16.msra.mxu0 %v2395
    %2405 = vmatpush.bf16.msra.mxu0 %v2394
    %2406 = vmatpush.bf16.msra.mxu0 %v2393
    %2407 = vmatpush.bf16.msra.mxu0 %v2392
    %2408 = vmatpush.bf16.msra.mxu0 %v2391
    %2409 = vmatpush.bf16.msra.mxu0 %v2390
    %2410 = vmatpush.bf16.msra.mxu0 %v2389
    %2411 = vmatpush.bf16.msra.mxu0 %v2388
    %2412 = vmatmul.bf16.gmra.mxu0 %v2335
    %v2413 = vpop.f32.mrf.mxu0
    %v2414 = vadd.f32 %v2354, %v2413
    %v2415 = vpop.f32.mrf.mxu0
    %2416 = vdwg.mxu0
    %2417 = vst [vmem:[#allocation3] sm:$0x3] %v2414
    // Predicated region
    $region30: #{cnn_forward.1} parent=1 // pred_check
      _
    $region31: #{cnn_forward.1} parent=1 // pred_check_branch
      %2419 = sbr.rel (0) target = $region33
    $region32: #{cnn_forward.1} parent=1 // pred_region
      %2421 = vsyncadd [#allocation4], 0
      %s2423 = sshll.u32 [#allocation3], 4
      %s2424 = int_to_ptr.vmem [resolvable:$true] %s2423
      %s2425 = sshll.u32 %s7, 4
      %s2426 = int_to_ptr.hbm [resolvable:$true] %s2425
      %2428 = dma.vmem_to_hbm [thread:$0]  %s2424, 32, %s2426, [#allocation4]
    $region33: #{cnn_forward.1} parent=1 // pred_fallthru
      _
    // Predicated region
    $region34: #{cnn_forward.1} parent=1 // pred_check
      _
    $region35: #{cnn_forward.1} parent=1 // pred_check_branch
      %2430 = sbr.rel (0) target = $region37
    $region36: #{cnn_forward.1} parent=1 // pred_region
      %2432 = dma.done [#allocation4], 32
    $region37: #{cnn_forward.1} parent=1 // pred_fallthru
      _
    %2433 = vsyncpa [#allocation4], 1

</llo_original>
